<compile_context>
chip_gen: v6e
topology: v6e:2x2x1
jax: 0.10.0
libtpu: 0.0.40
codegen_flags: <defaults>
</compile_context>

<pallas_src>
import jax
import jax.numpy as jnp
from jax import lax
from jax.experimental import pallas as pl
from jax.experimental.pallas import tpu as pltpu


def _make_res_lstm_kernel(T, B, D, H, proj_residual):
    def kernel(*refs):
        if proj_residual:
            (x2d_ref, wii_ref, bifo_ref, wir_ref, wrec_ref, bhh_ref,
             h0_ref, c0_ref,
             out_ref, hT_ref, cT_ref,
             pre_sc, res_sc) = refs
        else:
            (x2d_ref, wii_ref, bifo_ref, wrec_ref, bhh_ref,
             h0_ref, c0_ref,
             out_ref, hT_ref, cT_ref,
             pre_sc) = refs

        # ---- hoisted, input-only precompute: one batched matmul each ----
        x2d = x2d_ref[...]                                                  # (T*B, D)
        pre_sc[...] = (jnp.dot(x2d, wii_ref[...],
                               preferred_element_type=jnp.float32)
                       + bifo_ref[...])                                     # (T*B, 3H)
        if proj_residual:
            res_sc[...] = jnp.dot(x2d, wir_ref[...],
                                  preferred_element_type=jnp.float32)       # (T*B, H)

        # ---- loop-invariant loads / broadcasts, hoisted out of the recurrence ----
        wrec = wrec_ref[...]                                                # (2H, 4H)
        bhh_b = jnp.broadcast_to(bhh_ref[...], (B, H))                      # (B, H)

        def step(t, carry):
            h, c = carry
            row = pl.multiple_of(t * B, B)
            pre_t = pre_sc[pl.ds(row, B), :]                                # (B, 3H)
            if proj_residual:
                res_t = res_sc[pl.ds(row, B), :]                            # (B, H)
            else:
                res_t = x2d_ref[pl.ds(row, B), :]                           # (B, H) raw input

            hc = jnp.concatenate([h, c], axis=-1)                           # (B, 2H)
            rec = jnp.dot(hc, wrec, preferred_element_type=jnp.float32)     # (B, 4H) fused dot

            ifo = pre_t + rec[:, : 3 * H]
            ingate = jax.nn.sigmoid(ifo[:, 0 * H:1 * H])
            forgetgate = jax.nn.sigmoid(ifo[:, 1 * H:2 * H])
            outgate = jax.nn.sigmoid(ifo[:, 2 * H:3 * H])
            cellgate = jnp.tanh(rec[:, 3 * H:] + bhh_b)

            c_new = forgetgate * c + ingate * cellgate
            h_new = outgate * (jnp.tanh(c_new) + res_t)

            out_ref[t] = h_new
            return (h_new, c_new)

        # Full unroll for short sequences; bounded unroll for long ones (code-size control).
        unroll = T if T <= 16 else 8
        hT, cT = lax.fori_loop(0, T, step, (h0_ref[...], c0_ref[...]), unroll=unroll)
        hT_ref[...] = hT
        cT_ref[...] = cT

    return kernel


def res_lstm_layer(inputs, hidden, params):
    """inputs: (T, B, D); hidden: ((1,B,H), (1,B,H)). Returns (outputs (T,B,H), (hT, cT))."""
    T, B, D = inputs.shape
    h0 = hidden[0][0]                      # squeeze(0)
    c0 = hidden[1][0]
    H = h0.shape[-1]
    f32 = jnp.float32
    proj_residual = (D != H)               # static branch, mirrors the PyTorch cell

    # Pre-transpose / fuse parameters (pure layout work, done once in the wrapper).
    wii_t = params["weight_ii"].T.astype(f32)                                    # (D, 3H)
    bifo = (params["bias_ii"] + params["bias_ih"] + params["bias_ic"]
            ).reshape(1, 3 * H).astype(f32)                                      # (1, 3H)
    wrec = jnp.concatenate(
        [jnp.concatenate([params["weight_ih"].T, params["weight_hh"].T], axis=1),
         jnp.concatenate([params["weight_ic"].T, jnp.zeros((H, H), f32)], axis=1)],
        axis=0).astype(f32)                                                      # (2H, 4H)
    bhh = params["bias_hh"].reshape(1, H).astype(f32)

    x2d = inputs.reshape(T * B, D).astype(f32)                                   # time-flattened slab

    args = [x2d, wii_t, bifo]
    scratch = [pltpu.VMEM((T * B, 3 * H), f32)]          # hoisted i/f/o input projection
    if proj_residual:
        args.append(params["weight_ir"].T.astype(f32))   # (D, H)
        scratch.append(pltpu.VMEM((T * B, H), f32))      # hoisted residual projection
    args += [wrec, bhh, h0.astype(f32), c0.astype(f32)]

    # Size the scoped-VMEM limit to the problem (with headroom), clamped to physical-safe bounds.
    est_bytes = 4 * (
        T * B * D + D * 3 * H + 3 * H + (D * H if proj_residual else 0)
        + 2 * H * 4 * H + H + 2 * B * H                              # inputs
        + T * B * H + 2 * B * H                                      # outputs
        + T * B * 3 * H + (T * B * H if proj_residual else 0))      # scratch
    vmem_limit = int(min(64 << 20, max(32 << 20, 2 * est_bytes + (2 << 20))))

    kernel = _make_res_lstm_kernel(T, B, D, H, proj_residual)
    outputs, hT, cT = pl.pallas_call(
        kernel,
        out_shape=(
            jax.ShapeDtypeStruct((T, B, H), f32),
            jax.ShapeDtypeStruct((B, H), f32),
            jax.ShapeDtypeStruct((B, H), f32),
        ),
        scratch_shapes=scratch,
        compiler_params=pltpu.CompilerParams(vmem_limit_bytes=vmem_limit),
    )(*args)
    return outputs, (hT, cT)


def reference_forward(inputs, hidden, p):
    """Pure-JAX mirror of the PyTorch ResLSTMLayer.forward (dropout never applied)."""
    T, B, D = inputs.shape
    h = hidden[0][0]
    c = hidden[1][0]
    H = h.shape[-1]
    outs = []
    for t in range(T):
        x = inputs[t]
        ifo = (x @ p["weight_ii"].T + p["bias_ii"]
               + h @ p["weight_ih"].T + p["bias_ih"]
               + c @ p["weight_ic"].T + p["bias_ic"])
        ingate, forgetgate, outgate = jnp.split(ifo, 3, axis=1)
        cellgate = jnp.tanh(h @ p["weight_hh"].T + p["bias_hh"])
        ingate = jax.nn.sigmoid(ingate)
        forgetgate = jax.nn.sigmoid(forgetgate)
        outgate = jax.nn.sigmoid(outgate)
        c = forgetgate * c + ingate * cellgate
        ry = jnp.tanh(c)
        res = x if D == H else x @ p["weight_ir"].T
        h = outgate * (ry + res)
        outs.append(h)
    return jnp.stack(outs, axis=0), (h, c)


def _make_params(key, D, H, scale=0.2):
    ks = jax.random.split(key, 9)
    return {
        "weight_ii": scale * jax.random.normal(ks[0], (3 * H, D), jnp.float32),
        "weight_ic": scale * jax.random.normal(ks[1], (3 * H, H), jnp.float32),
        "weight_ih": scale * jax.random.normal(ks[2], (3 * H, H), jnp.float32),
        "bias_ii": scale * jax.random.normal(ks[3], (3 * H,), jnp.float32),
        "bias_ic": scale * jax.random.normal(ks[4], (3 * H,), jnp.float32),
        "bias_ih": scale * jax.random.normal(ks[5], (3 * H,), jnp.float32),
        "weight_hh": scale * jax.random.normal(ks[6], (H, H), jnp.float32),
        "bias_hh": scale * jax.random.normal(ks[7], (H,), jnp.float32),
        "weight_ir": scale * jax.random.normal(ks[8], (H, D), jnp.float32),
    }


if __name__ == "__main__":
    # TODO(synk): the PyTorch cell stores a `dropout` attribute but never applies it in forward,
    #             so dropout is omitted here.
    T, B, H = 8, 2, 32
    key = jax.random.PRNGKey(0)

    for D in (16, 32):   # D != H exercises the weight_ir projection; D == H the identity residual
        kp, kx, kh, kc, key = jax.random.split(key, 5)
        params = _make_params(kp, D, H)
        inputs = jax.random.normal(kx, (T, B, D), jnp.float32)
        h0 = jax.random.normal(kh, (1, B, H), jnp.float32)
        c0 = jax.random.normal(kc, (1, B, H), jnp.float32)
        hidden = (h0, c0)

        outs, (hT, cT) = res_lstm_layer(inputs, hidden, params)
        jax.block_until_ready((outs, hT, cT))

        ref_outs, (ref_h, ref_c) = reference_forward(inputs, hidden, params)
        assert jnp.allclose(outs, ref_outs, atol=2e-3, rtol=2e-3), (
            D, float(jnp.max(jnp.abs(outs - ref_outs))))
        assert jnp.allclose(hT, ref_h, atol=2e-3, rtol=2e-3)
        assert jnp.allclose(cT, ref_c, atol=2e-3, rtol=2e-3)

    print("KERNEL_OK")
</pallas_src>

<mosaic_0001>
module attributes {stable_mosaic.version = 11 : i64} {
  func.func @kernel(%arg0: memref<16x16xf32, #tpu.memory_space<vmem>>, %arg1: memref<16x96xf32, #tpu.memory_space<vmem>>, %arg2: memref<1x96xf32, #tpu.memory_space<vmem>>, %arg3: memref<16x32xf32, #tpu.memory_space<vmem>>, %arg4: memref<64x128xf32, #tpu.memory_space<vmem>>, %arg5: memref<1x32xf32, #tpu.memory_space<vmem>>, %arg6: memref<2x32xf32, #tpu.memory_space<vmem>>, %arg7: memref<2x32xf32, #tpu.memory_space<vmem>>, %arg8: memref<8x2x32xf32, #tpu.memory_space<vmem>>, %arg9: memref<2x32xf32, #tpu.memory_space<vmem>>, %arg10: memref<2x32xf32, #tpu.memory_space<vmem>>, %arg11: memref<16x96xf32, #tpu.memory_space<vmem>>, %arg12: memref<16x32xf32, #tpu.memory_space<vmem>>) attributes {dimension_semantics = [], scalar_prefetch = 0 : i64, scratch_operands = 2 : i64, tpu.core_type = #tpu.core_type<tc>} {
    %c0 = arith.constant 0 : index
    %c0_0 = arith.constant 0 : index
    %0 = vector.load %arg0[%c0, %c0_0] : memref<16x16xf32, #tpu.memory_space<vmem>>, vector<16x16xf32>
    %c0_1 = arith.constant 0 : index
    %c0_2 = arith.constant 0 : index
    %1 = vector.load %arg1[%c0_1, %c0_2] : memref<16x96xf32, #tpu.memory_space<vmem>>, vector<16x96xf32>
    %cst = arith.constant dense<0.000000e+00> : vector<16x96xf32>
    %2 = tpu.matmul %0, %1, %cst {dimension_numbers = #tpu.dot_dimension_numbers<[1], [0], [0], [1], [0, 0, 1, 1], [], []>} : vector<16x16xf32>, vector<16x96xf32>, vector<16x96xf32> -> vector<16x96xf32>
    %c0_3 = arith.constant 0 : index
    %c0_4 = arith.constant 0 : index
    %3 = vector.load %arg2[%c0_3, %c0_4] : memref<1x96xf32, #tpu.memory_space<vmem>>, vector<1x96xf32>
    %4 = vector.broadcast %3 : vector<1x96xf32> to vector<16x96xf32>
    %5 = arith.addf %2, %4 : vector<16x96xf32>
    %c0_5 = arith.constant 0 : index
    %c0_6 = arith.constant 0 : index
    %6 = vector.load %arg11[%c0_5, %c0_6] : memref<16x96xf32, #tpu.memory_space<vmem>>, vector<16x96xf32>
    tpu.vector_store %arg11[%c0_5, %c0_6], %5 {strides = array<i32>} : memref<16x96xf32, #tpu.memory_space<vmem>>, vector<16x96xf32>,
    %c0_7 = arith.constant 0 : index
    %c0_8 = arith.constant 0 : index
    %7 = vector.load %arg3[%c0_7, %c0_8] : memref<16x32xf32, #tpu.memory_space<vmem>>, vector<16x32xf32>
    %cst_9 = arith.constant dense<0.000000e+00> : vector<16x32xf32>
    %8 = tpu.matmul %0, %7, %cst_9 {dimension_numbers = #tpu.dot_dimension_numbers<[1], [0], [0], [1], [0, 0, 1, 1], [], []>} : vector<16x16xf32>, vector<16x32xf32>, vector<16x32xf32> -> vector<16x32xf32>
    %c0_10 = arith.constant 0 : index
    %c0_11 = arith.constant 0 : index
    %9 = vector.load %arg12[%c0_10, %c0_11] : memref<16x32xf32, #tpu.memory_space<vmem>>, vector<16x32xf32>
    tpu.vector_store %arg12[%c0_10, %c0_11], %8 {strides = array<i32>} : memref<16x32xf32, #tpu.memory_space<vmem>>, vector<16x32xf32>,
    %c0_12 = arith.constant 0 : index
    %c0_13 = arith.constant 0 : index
    %10 = vector.load %arg4[%c0_12, %c0_13] : memref<64x128xf32, #tpu.memory_space<vmem>>, vector<64x128xf32>
    %c0_14 = arith.constant 0 : index
    %c0_15 = arith.constant 0 : index
    %11 = vector.load %arg5[%c0_14, %c0_15] : memref<1x32xf32, #tpu.memory_space<vmem>>, vector<1x32xf32>
    %12 = vector.shape_cast %11 : vector<1x32xf32> to vector<1x32xf32>
    %13 = vector.broadcast %12 : vector<1x32xf32> to vector<2x32xf32>
    %c0_16 = arith.constant 0 : index
    %c0_17 = arith.constant 0 : index
    %14 = vector.load %arg6[%c0_16, %c0_17] : memref<2x32xf32, #tpu.memory_space<vmem>>, vector<2x32xf32>
    %c0_18 = arith.constant 0 : index
    %c0_19 = arith.constant 0 : index
    %15 = vector.load %arg7[%c0_18, %c0_19] : memref<2x32xf32, #tpu.memory_space<vmem>>, vector<2x32xf32>
    %c0_i32 = arith.constant 0 : i32
    %c2_i32 = arith.constant 2 : i32
    %16 = arith.muli %c0_i32, %c2_i32 : i32
    %17 = tpu.assume_multiple %16, 2 : i32
    %18 = arith.index_cast %17 : i32 to index
    %c0_20 = arith.constant 0 : index
    %19 = vector.load %arg11[%18, %c0_20] : memref<16x96xf32, #tpu.memory_space<vmem>>, vector<2x96xf32>
    %20 = arith.index_cast %17 : i32 to index
    %c0_21 = arith.constant 0 : index
    %21 = vector.load %arg12[%20, %c0_21] : memref<16x32xf32, #tpu.memory_space<vmem>>, vector<2x32xf32>
    %22 = tpu.concatenate %14, %15 in 1 : vector<2x32xf32>, vector<2x32xf32> -> vector<2x64xf32>
    %cst_22 = arith.constant dense<0.000000e+00> : vector<2x128xf32>
    %23 = tpu.matmul %22, %10, %cst_22 {dimension_numbers = #tpu.dot_dimension_numbers<[1], [0], [0], [1], [0, 0, 1, 1], [], []>} : vector<2x64xf32>, vector<64x128xf32>, vector<2x128xf32> -> vector<2x128xf32>
    %24 = vector.extract_strided_slice %23 {offsets = [0, 0], sizes = [2, 96], strides = [1, 1]} : vector<2x128xf32> to vector<2x96xf32>
    %25 = arith.addf %19, %24 : vector<2x96xf32>
    %26 = vector.extract_strided_slice %25 {offsets = [0, 0], sizes = [2, 32], strides = [1, 1]} : vector<2x96xf32> to vector<2x32xf32>
    %27 = arith.negf %26 : vector<2x32xf32>
    %28 = math.exp %27 : vector<2x32xf32>
    %cst_23 = arith.constant 1.000000e+00 : f32
    %29 = vector.broadcast %cst_23 : f32 to vector<2x32xf32>
    %30 = arith.addf %29, %28 : vector<2x32xf32>
    %31 = arith.divf %29, %30 : vector<2x32xf32>
    %32 = vector.extract_strided_slice %25 {offsets = [0, 32], sizes = [2, 32], strides = [1, 1]} : vector<2x96xf32> to vector<2x32xf32>
    %33 = arith.negf %32 : vector<2x32xf32>
    %34 = math.exp %33 : vector<2x32xf32>
    %cst_24 = arith.constant 1.000000e+00 : f32
    %35 = vector.broadcast %cst_24 : f32 to vector<2x32xf32>
    %36 = arith.addf %35, %34 : vector<2x32xf32>
    %37 = arith.divf %35, %36 : vector<2x32xf32>
    %38 = vector.extract_strided_slice %25 {offsets = [0, 64], sizes = [2, 32], strides = [1, 1]} : vector<2x96xf32> to vector<2x32xf32>
    %39 = arith.negf %38 : vector<2x32xf32>
    %40 = math.exp %39 : vector<2x32xf32>
    %cst_25 = arith.constant 1.000000e+00 : f32
    %41 = vector.broadcast %cst_25 : f32 to vector<2x32xf32>
    %42 = arith.addf %41, %40 : vector<2x32xf32>
    %43 = arith.divf %41, %42 : vector<2x32xf32>
    %44 = vector.extract_strided_slice %23 {offsets = [0, 96], sizes = [2, 32], strides = [1, 1]} : vector<2x128xf32> to vector<2x32xf32>
    %45 = arith.addf %44, %13 : vector<2x32xf32>
    %46 = math.tanh %45 : vector<2x32xf32>
    %47 = arith.mulf %37, %15 : vector<2x32xf32>
    %48 = arith.mulf %31, %46 : vector<2x32xf32>
    %49 = arith.addf %47, %48 : vector<2x32xf32>
    %50 = math.tanh %49 : vector<2x32xf32>
    %51 = arith.addf %50, %21 : vector<2x32xf32>
    %52 = arith.mulf %43, %51 : vector<2x32xf32>
    %53 = arith.index_cast %c0_i32 : i32 to index
    %c0_26 = arith.constant 0 : index
    %c0_27 = arith.constant 0 : index
    %54 = vector.load %arg8[%53, %c0_26, %c0_27] : memref<8x2x32xf32, #tpu.memory_space<vmem>>, vector<1x2x32xf32>
    %55 = vector.shape_cast %54 : vector<1x2x32xf32> to vector<2x32xf32>
    %56 = vector.shape_cast %52 : vector<2x32xf32> to vector<1x2x32xf32>
    tpu.vector_store %arg8[%53, %c0_26, %c0_27], %56 {strides = array<i32>} : memref<8x2x32xf32, #tpu.memory_space<vmem>>, vector<1x2x32xf32>,
    %c1_i32 = arith.constant 1 : i32
    %c2_i32_28 = arith.constant 2 : i32
    %57 = arith.muli %c1_i32, %c2_i32_28 : i32
    %58 = tpu.assume_multiple %57, 2 : i32
    %59 = arith.index_cast %58 : i32 to index
    %c0_29 = arith.constant 0 : index
    %60 = vector.load %arg11[%59, %c0_29] : memref<16x96xf32, #tpu.memory_space<vmem>>, vector<2x96xf32>
    %61 = arith.index_cast %58 : i32 to index
    %c0_30 = arith.constant 0 : index
    %62 = vector.load %arg12[%61, %c0_30] : memref<16x32xf32, #tpu.memory_space<vmem>>, vector<2x32xf32>
    %63 = tpu.concatenate %52, %49 in 1 : vector<2x32xf32>, vector<2x32xf32> -> vector<2x64xf32>
    %cst_31 = arith.constant dense<0.000000e+00> : vector<2x128xf32>
    %64 = tpu.matmul %63, %10, %cst_31 {dimension_numbers = #tpu.dot_dimension_numbers<[1], [0], [0], [1], [0, 0, 1, 1], [], []>} : vector<2x64xf32>, vector<64x128xf32>, vector<2x128xf32> -> vector<2x128xf32>
    %65 = vector.extract_strided_slice %64 {offsets = [0, 0], sizes = [2, 96], strides = [1, 1]} : vector<2x128xf32> to vector<2x96xf32>
    %66 = arith.addf %60, %65 : vector<2x96xf32>
    %67 = vector.extract_strided_slice %66 {offsets = [0, 0], sizes = [2, 32], strides = [1, 1]} : vector<2x96xf32> to vector<2x32xf32>
    %68 = arith.negf %67 : vector<2x32xf32>
    %69 = math.exp %68 : vector<2x32xf32>
    %cst_32 = arith.constant 1.000000e+00 : f32
    %70 = vector.broadcast %cst_32 : f32 to vector<2x32xf32>
    %71 = arith.addf %70, %69 : vector<2x32xf32>
    %72 = arith.divf %70, %71 : vector<2x32xf32>
    %73 = vector.extract_strided_slice %66 {offsets = [0, 32], sizes = [2, 32], strides = [1, 1]} : vector<2x96xf32> to vector<2x32xf32>
    %74 = arith.negf %73 : vector<2x32xf32>
    %75 = math.exp %74 : vector<2x32xf32>
    %cst_33 = arith.constant 1.000000e+00 : f32
    %76 = vector.broadcast %cst_33 : f32 to vector<2x32xf32>
    %77 = arith.addf %76, %75 : vector<2x32xf32>
    %78 = arith.divf %76, %77 : vector<2x32xf32>
    %79 = vector.extract_strided_slice %66 {offsets = [0, 64], sizes = [2, 32], strides = [1, 1]} : vector<2x96xf32> to vector<2x32xf32>
    %80 = arith.negf %79 : vector<2x32xf32>
    %81 = math.exp %80 : vector<2x32xf32>
    %cst_34 = arith.constant 1.000000e+00 : f32
    %82 = vector.broadcast %cst_34 : f32 to vector<2x32xf32>
    %83 = arith.addf %82, %81 : vector<2x32xf32>
    %84 = arith.divf %82, %83 : vector<2x32xf32>
    %85 = vector.extract_strided_slice %64 {offsets = [0, 96], sizes = [2, 32], strides = [1, 1]} : vector<2x128xf32> to vector<2x32xf32>
    %86 = arith.addf %85, %13 : vector<2x32xf32>
    %87 = math.tanh %86 : vector<2x32xf32>
    %88 = arith.mulf %78, %49 : vector<2x32xf32>
    %89 = arith.mulf %72, %87 : vector<2x32xf32>
    %90 = arith.addf %88, %89 : vector<2x32xf32>
    %91 = math.tanh %90 : vector<2x32xf32>
    %92 = arith.addf %91, %62 : vector<2x32xf32>
    %93 = arith.mulf %84, %92 : vector<2x32xf32>
    %94 = arith.index_cast %c1_i32 : i32 to index
    %c0_35 = arith.constant 0 : index
    %c0_36 = arith.constant 0 : index
    %95 = vector.load %arg8[%94, %c0_35, %c0_36] : memref<8x2x32xf32, #tpu.memory_space<vmem>>, vector<1x2x32xf32>
    %96 = vector.shape_cast %95 : vector<1x2x32xf32> to vector<2x32xf32>
    %97 = vector.shape_cast %93 : vector<2x32xf32> to vector<1x2x32xf32>
    tpu.vector_store %arg8[%94, %c0_35, %c0_36], %97 {strides = array<i32>} : memref<8x2x32xf32, #tpu.memory_space<vmem>>, vector<1x2x32xf32>,
    %c2_i32_37 = arith.constant 2 : i32
    %c2_i32_38 = arith.constant 2 : i32
    %98 = arith.muli %c2_i32_37, %c2_i32_38 : i32
    %99 = tpu.assume_multiple %98, 2 : i32
    %100 = arith.index_cast %99 : i32 to index
    %c0_39 = arith.constant 0 : index
    %101 = vector.load %arg11[%100, %c0_39] : memref<16x96xf32, #tpu.memory_space<vmem>>, vector<2x96xf32>
    %102 = arith.index_cast %99 : i32 to index
    %c0_40 = arith.constant 0 : index
    %103 = vector.load %arg12[%102, %c0_40] : memref<16x32xf32, #tpu.memory_space<vmem>>, vector<2x32xf32>
    %104 = tpu.concatenate %93, %90 in 1 : vector<2x32xf32>, vector<2x32xf32> -> vector<2x64xf32>
    %cst_41 = arith.constant dense<0.000000e+00> : vector<2x128xf32>
    %105 = tpu.matmul %104, %10, %cst_41 {dimension_numbers = #tpu.dot_dimension_numbers<[1], [0], [0], [1], [0, 0, 1, 1], [], []>} : vector<2x64xf32>, vector<64x128xf32>, vector<2x128xf32> -> vector<2x128xf32>
    %106 = vector.extract_strided_slice %105 {offsets = [0, 0], sizes = [2, 96], strides = [1, 1]} : vector<2x128xf32> to vector<2x96xf32>
    %107 = arith.addf %101, %106 : vector<2x96xf32>
    %108 = vector.extract_strided_slice %107 {offsets = [0, 0], sizes = [2, 32], strides = [1, 1]} : vector<2x96xf32> to vector<2x32xf32>
    %109 = arith.negf %108 : vector<2x32xf32>
    %110 = math.exp %109 : vector<2x32xf32>
    %cst_42 = arith.constant 1.000000e+00 : f32
    %111 = vector.broadcast %cst_42 : f32 to vector<2x32xf32>
    %112 = arith.addf %111, %110 : vector<2x32xf32>
    %113 = arith.divf %111, %112 : vector<2x32xf32>
    %114 = vector.extract_strided_slice %107 {offsets = [0, 32], sizes = [2, 32], strides = [1, 1]} : vector<2x96xf32> to vector<2x32xf32>
    %115 = arith.negf %114 : vector<2x32xf32>
    %116 = math.exp %115 : vector<2x32xf32>
    %cst_43 = arith.constant 1.000000e+00 : f32
    %117 = vector.broadcast %cst_43 : f32 to vector<2x32xf32>
    %118 = arith.addf %117, %116 : vector<2x32xf32>
    %119 = arith.divf %117, %118 : vector<2x32xf32>
    %120 = vector.extract_strided_slice %107 {offsets = [0, 64], sizes = [2, 32], strides = [1, 1]} : vector<2x96xf32> to vector<2x32xf32>
    %121 = arith.negf %120 : vector<2x32xf32>
    %122 = math.exp %121 : vector<2x32xf32>
    %cst_44 = arith.constant 1.000000e+00 : f32
    %123 = vector.broadcast %cst_44 : f32 to vector<2x32xf32>
    %124 = arith.addf %123, %122 : vector<2x32xf32>
    %125 = arith.divf %123, %124 : vector<2x32xf32>
    %126 = vector.extract_strided_slice %105 {offsets = [0, 96], sizes = [2, 32], strides = [1, 1]} : vector<2x128xf32> to vector<2x32xf32>
    %127 = arith.addf %126, %13 : vector<2x32xf32>
    %128 = math.tanh %127 : vector<2x32xf32>
    %129 = arith.mulf %119, %90 : vector<2x32xf32>
    %130 = arith.mulf %113, %128 : vector<2x32xf32>
    %131 = arith.addf %129, %130 : vector<2x32xf32>
    %132 = math.tanh %131 : vector<2x32xf32>
    %133 = arith.addf %132, %103 : vector<2x32xf32>
    %134 = arith.mulf %125, %133 : vector<2x32xf32>
    %135 = arith.index_cast %c2_i32_37 : i32 to index
    %c0_45 = arith.constant 0 : index
    %c0_46 = arith.constant 0 : index
    %136 = vector.load %arg8[%135, %c0_45, %c0_46] : memref<8x2x32xf32, #tpu.memory_space<vmem>>, vector<1x2x32xf32>
    %137 = vector.shape_cast %136 : vector<1x2x32xf32> to vector<2x32xf32>
    %138 = vector.shape_cast %134 : vector<2x32xf32> to vector<1x2x32xf32>
    tpu.vector_store %arg8[%135, %c0_45, %c0_46], %138 {strides = array<i32>} : memref<8x2x32xf32, #tpu.memory_space<vmem>>, vector<1x2x32xf32>,
    %c3_i32 = arith.constant 3 : i32
    %c2_i32_47 = arith.constant 2 : i32
    %139 = arith.muli %c3_i32, %c2_i32_47 : i32
    %140 = tpu.assume_multiple %139, 2 : i32
    %141 = arith.index_cast %140 : i32 to index
    %c0_48 = arith.constant 0 : index
    %142 = vector.load %arg11[%141, %c0_48] : memref<16x96xf32, #tpu.memory_space<vmem>>, vector<2x96xf32>
    %143 = arith.index_cast %140 : i32 to index
    %c0_49 = arith.constant 0 : index
    %144 = vector.load %arg12[%143, %c0_49] : memref<16x32xf32, #tpu.memory_space<vmem>>, vector<2x32xf32>
    %145 = tpu.concatenate %134, %131 in 1 : vector<2x32xf32>, vector<2x32xf32> -> vector<2x64xf32>
    %cst_50 = arith.constant dense<0.000000e+00> : vector<2x128xf32>
    %146 = tpu.matmul %145, %10, %cst_50 {dimension_numbers = #tpu.dot_dimension_numbers<[1], [0], [0], [1], [0, 0, 1, 1], [], []>} : vector<2x64xf32>, vector<64x128xf32>, vector<2x128xf32> -> vector<2x128xf32>
    %147 = vector.extract_strided_slice %146 {offsets = [0, 0], sizes = [2, 96], strides = [1, 1]} : vector<2x128xf32> to vector<2x96xf32>
    %148 = arith.addf %142, %147 : vector<2x96xf32>
    %149 = vector.extract_strided_slice %148 {offsets = [0, 0], sizes = [2, 32], strides = [1, 1]} : vector<2x96xf32> to vector<2x32xf32>
    %150 = arith.negf %149 : vector<2x32xf32>
    %151 = math.exp %150 : vector<2x32xf32>
    %cst_51 = arith.constant 1.000000e+00 : f32
    %152 = vector.broadcast %cst_51 : f32 to vector<2x32xf32>
    %153 = arith.addf %152, %151 : vector<2x32xf32>
    %154 = arith.divf %152, %153 : vector<2x32xf32>
    %155 = vector.extract_strided_slice %148 {offsets = [0, 32], sizes = [2, 32], strides = [1, 1]} : vector<2x96xf32> to vector<2x32xf32>
    %156 = arith.negf %155 : vector<2x32xf32>
    %157 = math.exp %156 : vector<2x32xf32>
    %cst_52 = arith.constant 1.000000e+00 : f32
    %158 = vector.broadcast %cst_52 : f32 to vector<2x32xf32>
    %159 = arith.addf %158, %157 : vector<2x32xf32>
    %160 = arith.divf %158, %159 : vector<2x32xf32>
    %161 = vector.extract_strided_slice %148 {offsets = [0, 64], sizes = [2, 32], strides = [1, 1]} : vector<2x96xf32> to vector<2x32xf32>
    %162 = arith.negf %161 : vector<2x32xf32>
    %163 = math.exp %162 : vector<2x32xf32>
    %cst_53 = arith.constant 1.000000e+00 : f32
    %164 = vector.broadcast %cst_53 : f32 to vector<2x32xf32>
    %165 = arith.addf %164, %163 : vector<2x32xf32>
    %166 = arith.divf %164, %165 : vector<2x32xf32>
    %167 = vector.extract_strided_slice %146 {offsets = [0, 96], sizes = [2, 32], strides = [1, 1]} : vector<2x128xf32> to vector<2x32xf32>
    %168 = arith.addf %167, %13 : vector<2x32xf32>
    %169 = math.tanh %168 : vector<2x32xf32>
    %170 = arith.mulf %160, %131 : vector<2x32xf32>
    %171 = arith.mulf %154, %169 : vector<2x32xf32>
    %172 = arith.addf %170, %171 : vector<2x32xf32>
    %173 = math.tanh %172 : vector<2x32xf32>
    %174 = arith.addf %173, %144 : vector<2x32xf32>
    %175 = arith.mulf %166, %174 : vector<2x32xf32>
    %176 = arith.index_cast %c3_i32 : i32 to index
    %c0_54 = arith.constant 0 : index
    %c0_55 = arith.constant 0 : index
    %177 = vector.load %arg8[%176, %c0_54, %c0_55] : memref<8x2x32xf32, #tpu.memory_space<vmem>>, vector<1x2x32xf32>
    %178 = vector.shape_cast %177 : vector<1x2x32xf32> to vector<2x32xf32>
    %179 = vector.shape_cast %175 : vector<2x32xf32> to vector<1x2x32xf32>
    tpu.vector_store %arg8[%176, %c0_54, %c0_55], %179 {strides = array<i32>} : memref<8x2x32xf32, #tpu.memory_space<vmem>>, vector<1x2x32xf32>,
    %c4_i32 = arith.constant 4 : i32
    %c2_i32_56 = arith.constant 2 : i32
    %180 = arith.muli %c4_i32, %c2_i32_56 : i32
    %181 = tpu.assume_multiple %180, 2 : i32
    %182 = arith.index_cast %181 : i32 to index
    %c0_57 = arith.constant 0 : index
    %183 = vector.load %arg11[%182, %c0_57] : memref<16x96xf32, #tpu.memory_space<vmem>>, vector<2x96xf32>
    %184 = arith.index_cast %181 : i32 to index
    %c0_58 = arith.constant 0 : index
    %185 = vector.load %arg12[%184, %c0_58] : memref<16x32xf32, #tpu.memory_space<vmem>>, vector<2x32xf32>
    %186 = tpu.concatenate %175, %172 in 1 : vector<2x32xf32>, vector<2x32xf32> -> vector<2x64xf32>
    %cst_59 = arith.constant dense<0.000000e+00> : vector<2x128xf32>
    %187 = tpu.matmul %186, %10, %cst_59 {dimension_numbers = #tpu.dot_dimension_numbers<[1], [0], [0], [1], [0, 0, 1, 1], [], []>} : vector<2x64xf32>, vector<64x128xf32>, vector<2x128xf32> -> vector<2x128xf32>
    %188 = vector.extract_strided_slice %187 {offsets = [0, 0], sizes = [2, 96], strides = [1, 1]} : vector<2x128xf32> to vector<2x96xf32>
    %189 = arith.addf %183, %188 : vector<2x96xf32>
    %190 = vector.extract_strided_slice %189 {offsets = [0, 0], sizes = [2, 32], strides = [1, 1]} : vector<2x96xf32> to vector<2x32xf32>
    %191 = arith.negf %190 : vector<2x32xf32>
    %192 = math.exp %191 : vector<2x32xf32>
    %cst_60 = arith.constant 1.000000e+00 : f32
    %193 = vector.broadcast %cst_60 : f32 to vector<2x32xf32>
    %194 = arith.addf %193, %192 : vector<2x32xf32>
    %195 = arith.divf %193, %194 : vector<2x32xf32>
    %196 = vector.extract_strided_slice %189 {offsets = [0, 32], sizes = [2, 32], strides = [1, 1]} : vector<2x96xf32> to vector<2x32xf32>
    %197 = arith.negf %196 : vector<2x32xf32>
    %198 = math.exp %197 : vector<2x32xf32>
    %cst_61 = arith.constant 1.000000e+00 : f32
    %199 = vector.broadcast %cst_61 : f32 to vector<2x32xf32>
    %200 = arith.addf %199, %198 : vector<2x32xf32>
    %201 = arith.divf %199, %200 : vector<2x32xf32>
    %202 = vector.extract_strided_slice %189 {offsets = [0, 64], sizes = [2, 32], strides = [1, 1]} : vector<2x96xf32> to vector<2x32xf32>
    %203 = arith.negf %202 : vector<2x32xf32>
    %204 = math.exp %203 : vector<2x32xf32>
    %cst_62 = arith.constant 1.000000e+00 : f32
    %205 = vector.broadcast %cst_62 : f32 to vector<2x32xf32>
    %206 = arith.addf %205, %204 : vector<2x32xf32>
    %207 = arith.divf %205, %206 : vector<2x32xf32>
    %208 = vector.extract_strided_slice %187 {offsets = [0, 96], sizes = [2, 32], strides = [1, 1]} : vector<2x128xf32> to vector<2x32xf32>
    %209 = arith.addf %208, %13 : vector<2x32xf32>
    %210 = math.tanh %209 : vector<2x32xf32>
    %211 = arith.mulf %201, %172 : vector<2x32xf32>
    %212 = arith.mulf %195, %210 : vector<2x32xf32>
    %213 = arith.addf %211, %212 : vector<2x32xf32>
    %214 = math.tanh %213 : vector<2x32xf32>
    %215 = arith.addf %214, %185 : vector<2x32xf32>
    %216 = arith.mulf %207, %215 : vector<2x32xf32>
    %217 = arith.index_cast %c4_i32 : i32 to index
    %c0_63 = arith.constant 0 : index
    %c0_64 = arith.constant 0 : index
    %218 = vector.load %arg8[%217, %c0_63, %c0_64] : memref<8x2x32xf32, #tpu.memory_space<vmem>>, vector<1x2x32xf32>
    %219 = vector.shape_cast %218 : vector<1x2x32xf32> to vector<2x32xf32>
    %220 = vector.shape_cast %216 : vector<2x32xf32> to vector<1x2x32xf32>
    tpu.vector_store %arg8[%217, %c0_63, %c0_64], %220 {strides = array<i32>} : memref<8x2x32xf32, #tpu.memory_space<vmem>>, vector<1x2x32xf32>,
    %c5_i32 = arith.constant 5 : i32
    %c2_i32_65 = arith.constant 2 : i32
    %221 = arith.muli %c5_i32, %c2_i32_65 : i32
    %222 = tpu.assume_multiple %221, 2 : i32
    %223 = arith.index_cast %222 : i32 to index
    %c0_66 = arith.constant 0 : index
    %224 = vector.load %arg11[%223, %c0_66] : memref<16x96xf32, #tpu.memory_space<vmem>>, vector<2x96xf32>
    %225 = arith.index_cast %222 : i32 to index
    %c0_67 = arith.constant 0 : index
    %226 = vector.load %arg12[%225, %c0_67] : memref<16x32xf32, #tpu.memory_space<vmem>>, vector<2x32xf32>
    %227 = tpu.concatenate %216, %213 in 1 : vector<2x32xf32>, vector<2x32xf32> -> vector<2x64xf32>
    %cst_68 = arith.constant dense<0.000000e+00> : vector<2x128xf32>
    %228 = tpu.matmul %227, %10, %cst_68 {dimension_numbers = #tpu.dot_dimension_numbers<[1], [0], [0], [1], [0, 0, 1, 1], [], []>} : vector<2x64xf32>, vector<64x128xf32>, vector<2x128xf32> -> vector<2x128xf32>
    %229 = vector.extract_strided_slice %228 {offsets = [0, 0], sizes = [2, 96], strides = [1, 1]} : vector<2x128xf32> to vector<2x96xf32>
    %230 = arith.addf %224, %229 : vector<2x96xf32>
    %231 = vector.extract_strided_slice %230 {offsets = [0, 0], sizes = [2, 32], strides = [1, 1]} : vector<2x96xf32> to vector<2x32xf32>
    %232 = arith.negf %231 : vector<2x32xf32>
    %233 = math.exp %232 : vector<2x32xf32>
    %cst_69 = arith.constant 1.000000e+00 : f32
    %234 = vector.broadcast %cst_69 : f32 to vector<2x32xf32>
    %235 = arith.addf %234, %233 : vector<2x32xf32>
    %236 = arith.divf %234, %235 : vector<2x32xf32>
    %237 = vector.extract_strided_slice %230 {offsets = [0, 32], sizes = [2, 32], strides = [1, 1]} : vector<2x96xf32> to vector<2x32xf32>
    %238 = arith.negf %237 : vector<2x32xf32>
    %239 = math.exp %238 : vector<2x32xf32>
    %cst_70 = arith.constant 1.000000e+00 : f32
    %240 = vector.broadcast %cst_70 : f32 to vector<2x32xf32>
    %241 = arith.addf %240, %239 : vector<2x32xf32>
    %242 = arith.divf %240, %241 : vector<2x32xf32>
    %243 = vector.extract_strided_slice %230 {offsets = [0, 64], sizes = [2, 32], strides = [1, 1]} : vector<2x96xf32> to vector<2x32xf32>
    %244 = arith.negf %243 : vector<2x32xf32>
    %245 = math.exp %244 : vector<2x32xf32>
    %cst_71 = arith.constant 1.000000e+00 : f32
    %246 = vector.broadcast %cst_71 : f32 to vector<2x32xf32>
    %247 = arith.addf %246, %245 : vector<2x32xf32>
    %248 = arith.divf %246, %247 : vector<2x32xf32>
    %249 = vector.extract_strided_slice %228 {offsets = [0, 96], sizes = [2, 32], strides = [1, 1]} : vector<2x128xf32> to vector<2x32xf32>
    %250 = arith.addf %249, %13 : vector<2x32xf32>
    %251 = math.tanh %250 : vector<2x32xf32>
    %252 = arith.mulf %242, %213 : vector<2x32xf32>
    %253 = arith.mulf %236, %251 : vector<2x32xf32>
    %254 = arith.addf %252, %253 : vector<2x32xf32>
    %255 = math.tanh %254 : vector<2x32xf32>
    %256 = arith.addf %255, %226 : vector<2x32xf32>
    %257 = arith.mulf %248, %256 : vector<2x32xf32>
    %258 = arith.index_cast %c5_i32 : i32 to index
    %c0_72 = arith.constant 0 : index
    %c0_73 = arith.constant 0 : index
    %259 = vector.load %arg8[%258, %c0_72, %c0_73] : memref<8x2x32xf32, #tpu.memory_space<vmem>>, vector<1x2x32xf32>
    %260 = vector.shape_cast %259 : vector<1x2x32xf32> to vector<2x32xf32>
    %261 = vector.shape_cast %257 : vector<2x32xf32> to vector<1x2x32xf32>
    tpu.vector_store %arg8[%258, %c0_72, %c0_73], %261 {strides = array<i32>} : memref<8x2x32xf32, #tpu.memory_space<vmem>>, vector<1x2x32xf32>,
    %c6_i32 = arith.constant 6 : i32
    %c2_i32_74 = arith.constant 2 : i32
    %262 = arith.muli %c6_i32, %c2_i32_74 : i32
    %263 = tpu.assume_multiple %262, 2 : i32
    %264 = arith.index_cast %263 : i32 to index
    %c0_75 = arith.constant 0 : index
    %265 = vector.load %arg11[%264, %c0_75] : memref<16x96xf32, #tpu.memory_space<vmem>>, vector<2x96xf32>
    %266 = arith.index_cast %263 : i32 to index
    %c0_76 = arith.constant 0 : index
    %267 = vector.load %arg12[%266, %c0_76] : memref<16x32xf32, #tpu.memory_space<vmem>>, vector<2x32xf32>
    %268 = tpu.concatenate %257, %254 in 1 : vector<2x32xf32>, vector<2x32xf32> -> vector<2x64xf32>
    %cst_77 = arith.constant dense<0.000000e+00> : vector<2x128xf32>
    %269 = tpu.matmul %268, %10, %cst_77 {dimension_numbers = #tpu.dot_dimension_numbers<[1], [0], [0], [1], [0, 0, 1, 1], [], []>} : vector<2x64xf32>, vector<64x128xf32>, vector<2x128xf32> -> vector<2x128xf32>
    %270 = vector.extract_strided_slice %269 {offsets = [0, 0], sizes = [2, 96], strides = [1, 1]} : vector<2x128xf32> to vector<2x96xf32>
    %271 = arith.addf %265, %270 : vector<2x96xf32>
    %272 = vector.extract_strided_slice %271 {offsets = [0, 0], sizes = [2, 32], strides = [1, 1]} : vector<2x96xf32> to vector<2x32xf32>
    %273 = arith.negf %272 : vector<2x32xf32>
    %274 = math.exp %273 : vector<2x32xf32>
    %cst_78 = arith.constant 1.000000e+00 : f32
    %275 = vector.broadcast %cst_78 : f32 to vector<2x32xf32>
    %276 = arith.addf %275, %274 : vector<2x32xf32>
    %277 = arith.divf %275, %276 : vector<2x32xf32>
    %278 = vector.extract_strided_slice %271 {offsets = [0, 32], sizes = [2, 32], strides = [1, 1]} : vector<2x96xf32> to vector<2x32xf32>
    %279 = arith.negf %278 : vector<2x32xf32>
    %280 = math.exp %279 : vector<2x32xf32>
    %cst_79 = arith.constant 1.000000e+00 : f32
    %281 = vector.broadcast %cst_79 : f32 to vector<2x32xf32>
    %282 = arith.addf %281, %280 : vector<2x32xf32>
    %283 = arith.divf %281, %282 : vector<2x32xf32>
    %284 = vector.extract_strided_slice %271 {offsets = [0, 64], sizes = [2, 32], strides = [1, 1]} : vector<2x96xf32> to vector<2x32xf32>
    %285 = arith.negf %284 : vector<2x32xf32>
    %286 = math.exp %285 : vector<2x32xf32>
    %cst_80 = arith.constant 1.000000e+00 : f32
    %287 = vector.broadcast %cst_80 : f32 to vector<2x32xf32>
    %288 = arith.addf %287, %286 : vector<2x32xf32>
    %289 = arith.divf %287, %288 : vector<2x32xf32>
    %290 = vector.extract_strided_slice %269 {offsets = [0, 96], sizes = [2, 32], strides = [1, 1]} : vector<2x128xf32> to vector<2x32xf32>
    %291 = arith.addf %290, %13 : vector<2x32xf32>
    %292 = math.tanh %291 : vector<2x32xf32>
    %293 = arith.mulf %283, %254 : vector<2x32xf32>
    %294 = arith.mulf %277, %292 : vector<2x32xf32>
    %295 = arith.addf %293, %294 : vector<2x32xf32>
    %296 = math.tanh %295 : vector<2x32xf32>
    %297 = arith.addf %296, %267 : vector<2x32xf32>
    %298 = arith.mulf %289, %297 : vector<2x32xf32>
    %299 = arith.index_cast %c6_i32 : i32 to index
    %c0_81 = arith.constant 0 : index
    %c0_82 = arith.constant 0 : index
    %300 = vector.load %arg8[%299, %c0_81, %c0_82] : memref<8x2x32xf32, #tpu.memory_space<vmem>>, vector<1x2x32xf32>
    %301 = vector.shape_cast %300 : vector<1x2x32xf32> to vector<2x32xf32>
    %302 = vector.shape_cast %298 : vector<2x32xf32> to vector<1x2x32xf32>
    tpu.vector_store %arg8[%299, %c0_81, %c0_82], %302 {strides = array<i32>} : memref<8x2x32xf32, #tpu.memory_space<vmem>>, vector<1x2x32xf32>,
    %c7_i32 = arith.constant 7 : i32
    %c2_i32_83 = arith.constant 2 : i32
    %303 = arith.muli %c7_i32, %c2_i32_83 : i32
    %304 = tpu.assume_multiple %303, 2 : i32
    %305 = arith.index_cast %304 : i32 to index
    %c0_84 = arith.constant 0 : index
    %306 = vector.load %arg11[%305, %c0_84] : memref<16x96xf32, #tpu.memory_space<vmem>>, vector<2x96xf32>
    %307 = arith.index_cast %304 : i32 to index
    %c0_85 = arith.constant 0 : index
    %308 = vector.load %arg12[%307, %c0_85] : memref<16x32xf32, #tpu.memory_space<vmem>>, vector<2x32xf32>
    %309 = tpu.concatenate %298, %295 in 1 : vector<2x32xf32>, vector<2x32xf32> -> vector<2x64xf32>
    %cst_86 = arith.constant dense<0.000000e+00> : vector<2x128xf32>
    %310 = tpu.matmul %309, %10, %cst_86 {dimension_numbers = #tpu.dot_dimension_numbers<[1], [0], [0], [1], [0, 0, 1, 1], [], []>} : vector<2x64xf32>, vector<64x128xf32>, vector<2x128xf32> -> vector<2x128xf32>
    %311 = vector.extract_strided_slice %310 {offsets = [0, 0], sizes = [2, 96], strides = [1, 1]} : vector<2x128xf32> to vector<2x96xf32>
    %312 = arith.addf %306, %311 : vector<2x96xf32>
    %313 = vector.extract_strided_slice %312 {offsets = [0, 0], sizes = [2, 32], strides = [1, 1]} : vector<2x96xf32> to vector<2x32xf32>
    %314 = arith.negf %313 : vector<2x32xf32>
    %315 = math.exp %314 : vector<2x32xf32>
    %cst_87 = arith.constant 1.000000e+00 : f32
    %316 = vector.broadcast %cst_87 : f32 to vector<2x32xf32>
    %317 = arith.addf %316, %315 : vector<2x32xf32>
    %318 = arith.divf %316, %317 : vector<2x32xf32>
    %319 = vector.extract_strided_slice %312 {offsets = [0, 32], sizes = [2, 32], strides = [1, 1]} : vector<2x96xf32> to vector<2x32xf32>
    %320 = arith.negf %319 : vector<2x32xf32>
    %321 = math.exp %320 : vector<2x32xf32>
    %cst_88 = arith.constant 1.000000e+00 : f32
    %322 = vector.broadcast %cst_88 : f32 to vector<2x32xf32>
    %323 = arith.addf %322, %321 : vector<2x32xf32>
    %324 = arith.divf %322, %323 : vector<2x32xf32>
    %325 = vector.extract_strided_slice %312 {offsets = [0, 64], sizes = [2, 32], strides = [1, 1]} : vector<2x96xf32> to vector<2x32xf32>
    %326 = arith.negf %325 : vector<2x32xf32>
    %327 = math.exp %326 : vector<2x32xf32>
    %cst_89 = arith.constant 1.000000e+00 : f32
    %328 = vector.broadcast %cst_89 : f32 to vector<2x32xf32>
    %329 = arith.addf %328, %327 : vector<2x32xf32>
    %330 = arith.divf %328, %329 : vector<2x32xf32>
    %331 = vector.extract_strided_slice %310 {offsets = [0, 96], sizes = [2, 32], strides = [1, 1]} : vector<2x128xf32> to vector<2x32xf32>
    %332 = arith.addf %331, %13 : vector<2x32xf32>
    %333 = math.tanh %332 : vector<2x32xf32>
    %334 = arith.mulf %324, %295 : vector<2x32xf32>
    %335 = arith.mulf %318, %333 : vector<2x32xf32>
    %336 = arith.addf %334, %335 : vector<2x32xf32>
    %337 = math.tanh %336 : vector<2x32xf32>
    %338 = arith.addf %337, %308 : vector<2x32xf32>
    %339 = arith.mulf %330, %338 : vector<2x32xf32>
    %340 = arith.index_cast %c7_i32 : i32 to index
    %c0_90 = arith.constant 0 : index
    %c0_91 = arith.constant 0 : index
    %341 = vector.load %arg8[%340, %c0_90, %c0_91] : memref<8x2x32xf32, #tpu.memory_space<vmem>>, vector<1x2x32xf32>
    %342 = vector.shape_cast %341 : vector<1x2x32xf32> to vector<2x32xf32>
    %343 = vector.shape_cast %339 : vector<2x32xf32> to vector<1x2x32xf32>
    tpu.vector_store %arg8[%340, %c0_90, %c0_91], %343 {strides = array<i32>} : memref<8x2x32xf32, #tpu.memory_space<vmem>>, vector<1x2x32xf32>,
    %c8_i32 = arith.constant 8 : i32
    %c0_92 = arith.constant 0 : index
    %c0_93 = arith.constant 0 : index
    %344 = vector.load %arg9[%c0_92, %c0_93] : memref<2x32xf32, #tpu.memory_space<vmem>>, vector<2x32xf32>
    tpu.vector_store %arg9[%c0_92, %c0_93], %339 {strides = array<i32>} : memref<2x32xf32, #tpu.memory_space<vmem>>, vector<2x32xf32>,
    %c0_94 = arith.constant 0 : index
    %c0_95 = arith.constant 0 : index
    %345 = vector.load %arg10[%c0_94, %c0_95] : memref<2x32xf32, #tpu.memory_space<vmem>>, vector<2x32xf32>
    tpu.vector_store %arg10[%c0_94, %c0_95], %336 {strides = array<i32>} : memref<2x32xf32, #tpu.memory_space<vmem>>, vector<2x32xf32>,
    return
  }
}

</mosaic_0001>

<llo_original>
// kernel: tpu_custom_call.1
$region0: #{tpu_custom_call.1}
  #allocation0 [shape = 'u32[]', space=smem, size = 0x4, offset = 0x4, fixed_abs, tag = 'smem constant byte address 0x4 - core index']
  #allocation1 [shape = 'u32[144,128]{1,0:T(1,128)}', space=vmem, size = 0x12000, scoped, tag = 'internal scratch']
  #allocation2 [shape = 'f32[16,96]{1,0:T(8,128)}', space=vmem, size = 0x2000, scoped, tag = 'scratch operand']
  #allocation3 [shape = 'f32[16,32]{1,0:T(8,128)}', space=vmem, size = 0x2000, scoped, tag = 'scratch operand']
  %s0 = inlined_call_operand.hbm [shape: f32[16,16], index: 0, kind: input, shape index: {}]
  %s1 = inlined_call_operand.hbm [shape: f32[16,96], index: 1, kind: input, shape index: {}]
  %s2 = inlined_call_operand.vmem [shape: f32[1,96], index: 2, kind: input, shape index: {}]
  %s3 = inlined_call_operand.hbm [shape: f32[16,32], index: 3, kind: input, shape index: {}]
  %s4 = inlined_call_operand.hbm [shape: f32[64,128], index: 4, kind: input, shape index: {}]
  %s5 = inlined_call_operand.vmem [shape: f32[1,32], index: 5, kind: input, shape index: {}]
  %s6 = inlined_call_operand.vmem [shape: f32[2,32], index: 6, kind: input, shape index: {}]
  %s7 = inlined_call_operand.vmem [shape: f32[2,32], index: 7, kind: input, shape index: {}]
  %s8 = inlined_call_operand.hbm [shape: f32[8,2,32], index: 8, kind: output, shape index: {0}]
  %s9 = inlined_call_operand.hbm [shape: f32[2,32], index: 9, kind: output, shape index: {1}]
  %s10 = inlined_call_operand.hbm [shape: f32[2,32], index: 10, kind: output, shape index: {2}]
  %11 = xla_tuple %s8, %s9, %s10
  %s12 = sld [smem:[#allocation0]]
  $region74: #{tpu_custom_call.1} parent=0
    _
  %s14 = ssub.s32 1, %s12
  %s15 = scalar_select 0, %s14, %s12
  $region1: #{tpu_custom_call.1} parent=0
    #allocation4 [shape = 'u8[8192]{0}', space=vmem, size = 0x2000, scoped, tag = 'input window, operand 0, single buffered']
    #allocation5 [shape = 's32[1]{0}', space=sflag, size = 0x4, scoped, tag = 'scoped memory for tpu_custom_call.1']
    #allocation6 [shape = 's32[1]{0}', space=sflag, size = 0x4, scoped, tag = 'scoped memory for tpu_custom_call.1']
    #allocation7 [shape = 'u8[8192]{0}', space=vmem, size = 0x2000, scoped, tag = 'input window, operand 1, single buffered']
    #allocation8 [shape = 's32[1]{0}', space=sflag, size = 0x4, scoped, tag = 'scoped memory for tpu_custom_call.1']
    #allocation9 [shape = 'u8[8192]{0}', space=vmem, size = 0x2000, scoped, tag = 'input window, operand 3, single buffered']
    #allocation10 [shape = 'u8[32768]{0}', space=vmem, size = 0x8000, scoped, tag = 'input window, operand 4, single buffered']
    #allocation11 [shape = 's32[1]{0}', space=sflag, size = 0x4, scoped, tag = 'scoped memory for tpu_custom_call.1']
    #allocation12 [shape = 'u8[8192]{0}', space=vmem, size = 0x2000, scoped, tag = 'output window, operand 0, single buffered']
    #allocation13 [shape = 'u8[1024]{0}', space=vmem, size = 0x400, scoped, tag = 'output window, operand 1, single buffered']
    #allocation14 [shape = 's32[1]{0}', space=sflag, size = 0x4, scoped, tag = 'scoped memory for tpu_custom_call.1']
    #allocation15 [shape = 'u8[1024]{0}', space=vmem, size = 0x400, scoped, tag = 'output window, operand 2, single buffered']
    %16 = vsyncpa [#allocation5], 0
    %17 = vsyncpa [#allocation8], 0
    %18 = vsyncpa [#allocation11], 0
    %19 = vsyncpa [#allocation6], 0
    %20 = vsyncpa [#allocation14], 0
    // Predicated region
    $region2: #{tpu_custom_call.1} parent=1 // pred_check
      _
    $region3: #{tpu_custom_call.1} parent=1 // pred_check_branch
      %22 = sbr.rel (0) target = $region5
    $region4: #{tpu_custom_call.1} parent=1 // pred_region
      %s24 = ssub.s32 256, 256
      %25 = vsyncadd [#allocation5], %s24
      %s26 = sshll.u32 [#allocation4], 4
      %s27 = int_to_ptr.vmem [resolvable:$true] %s26
      %32 = dma.hbm_to_vmem [thread:$0]  %s0, 256, %s27, [#allocation5], 128, 128, 8
    $region5: #{tpu_custom_call.1} parent=1 // pred_fallthru
      _
    // Predicated region
    $region6: #{tpu_custom_call.1} parent=1 // pred_check
      _
    $region7: #{tpu_custom_call.1} parent=1 // pred_check_branch
      %34 = sbr.rel (0) target = $region9
    $region8: #{tpu_custom_call.1} parent=1 // pred_region
      %s36 = ssub.s32 256, 256
      %37 = vsyncadd [#allocation8], %s36
      %s38 = sshll.u32 [#allocation7], 4
      %s39 = int_to_ptr.vmem [resolvable:$true] %s38
      %44 = dma.hbm_to_vmem [thread:$0]  %s1, 256, %s39, [#allocation8], 128, 128, 8
    $region9: #{tpu_custom_call.1} parent=1 // pred_fallthru
      _
    // Predicated region
    $region10: #{tpu_custom_call.1} parent=1 // pred_check
      _
    $region11: #{tpu_custom_call.1} parent=1 // pred_check_branch
      %46 = sbr.rel (0) target = $region13
    $region12: #{tpu_custom_call.1} parent=1 // pred_region
      _
    $region13: #{tpu_custom_call.1} parent=1 // pred_fallthru
      _
    // Predicated region
    $region14: #{tpu_custom_call.1} parent=1 // pred_check
      _
    $region15: #{tpu_custom_call.1} parent=1 // pred_check_branch
      %48 = sbr.rel (0) target = $region17
    $region16: #{tpu_custom_call.1} parent=1 // pred_region
      %s50 = ssub.s32 256, 256
      %51 = vsyncadd [#allocation8], %s50
      %s52 = sshll.u32 [#allocation9], 4
      %s53 = int_to_ptr.vmem [resolvable:$true] %s52
      %58 = dma.hbm_to_vmem [thread:$0]  %s3, 256, %s53, [#allocation8], 128, 128, 8
    $region17: #{tpu_custom_call.1} parent=1 // pred_fallthru
      _
    // Predicated region
    $region18: #{tpu_custom_call.1} parent=1 // pred_check
      _
    $region19: #{tpu_custom_call.1} parent=1 // pred_check_branch
      %60 = sbr.rel (0) target = $region21
    $region20: #{tpu_custom_call.1} parent=1 // pred_region
      %s62 = ssub.s32 1024, 1024
      %63 = vsyncadd [#allocation11], %s62
      %s64 = sshll.u32 [#allocation10], 4
      %s65 = int_to_ptr.vmem [resolvable:$true] %s64
      %70 = dma.hbm_to_vmem [thread:$0]  %s4, 1024, %s65, [#allocation11], 128, 128, 8
    $region21: #{tpu_custom_call.1} parent=1 // pred_fallthru
      _
    // Predicated region
    $region22: #{tpu_custom_call.1} parent=1 // pred_check
      _
    $region23: #{tpu_custom_call.1} parent=1 // pred_check_branch
      %72 = sbr.rel (0) target = $region25
    $region24: #{tpu_custom_call.1} parent=1 // pred_region
      _
    $region25: #{tpu_custom_call.1} parent=1 // pred_fallthru
      _
    // Predicated region
    $region26: #{tpu_custom_call.1} parent=1 // pred_check
      _
    $region27: #{tpu_custom_call.1} parent=1 // pred_check_branch
      %74 = sbr.rel (0) target = $region29
    $region28: #{tpu_custom_call.1} parent=1 // pred_region
      _
    $region29: #{tpu_custom_call.1} parent=1 // pred_fallthru
      _
    // Predicated region
    $region30: #{tpu_custom_call.1} parent=1 // pred_check
      _
    $region31: #{tpu_custom_call.1} parent=1 // pred_check_branch
      %76 = sbr.rel (0) target = $region33
    $region32: #{tpu_custom_call.1} parent=1 // pred_region
      _
    $region33: #{tpu_custom_call.1} parent=1 // pred_fallthru
      _
    // Predicated region
    $region34: #{tpu_custom_call.1} parent=1 // pred_check
      _
    $region35: #{tpu_custom_call.1} parent=1 // pred_check_branch
      %78 = sbr.rel (0) target = $region37
    $region36: #{tpu_custom_call.1} parent=1 // pred_region
      %79 = dma.done [#allocation5], 256
    $region37: #{tpu_custom_call.1} parent=1 // pred_fallthru
      _
    // Predicated region
    $region38: #{tpu_custom_call.1} parent=1 // pred_check
      _
    $region39: #{tpu_custom_call.1} parent=1 // pred_check_branch
      %81 = sbr.rel (0) target = $region41
    $region40: #{tpu_custom_call.1} parent=1 // pred_region
      %82 = dma.done [#allocation8], 256
    $region41: #{tpu_custom_call.1} parent=1 // pred_fallthru
      _
    // Predicated region
    $region42: #{tpu_custom_call.1} parent=1 // pred_check
      _
    $region43: #{tpu_custom_call.1} parent=1 // pred_check_branch
      %84 = sbr.rel (0) target = $region45
    $region44: #{tpu_custom_call.1} parent=1 // pred_region
      %85 = dma.done [#allocation8], 256
    $region45: #{tpu_custom_call.1} parent=1 // pred_fallthru
      _
    // Predicated region
    $region46: #{tpu_custom_call.1} parent=1 // pred_check
      _
    $region47: #{tpu_custom_call.1} parent=1 // pred_check_branch
      %87 = sbr.rel (0) target = $region49
    $region48: #{tpu_custom_call.1} parent=1 // pred_region
      %88 = dma.done [#allocation11], 1024
    $region49: #{tpu_custom_call.1} parent=1 // pred_fallthru
      _
    %v89 = vld [vmem:[#allocation4] sm:$0xff]
    %v90 = vld [vmem:[#allocation4 + $0x8] sm:$0xff]
    %v91 = vld [vmem:[#allocation7] sm:$0xff]
    %v92 = vld [vmem:[#allocation7 + $0x8] sm:$0xff]
    %v93 = vld [vmem:[%s2] sm:$0x1]
    %v95 = vlaneseq
    %v96 = vshrl.u32 %v95, 7
    %v97 = vsub.s32 0, %v96
    %v98 = vrot.slane %v93, %v97
    %vm100 = vcmask 130048
    %v102 = vsel %vm100, %v89, 0
    %v105 = vsel %vm100, %v90, 0
    %107 = vmatprep.subr.mxu0 0.0
    %108 = vmatpush1.msra.mxu0 0.0
    %109 = vmatprep.subr.mxu0 0.0
    %110 = vmatpush1.msra.mxu0 0.0
    %111 = vmatprep.subr.mxu0 0.0
    %112 = vmatpush1.msra.mxu0 0.0
    %113 = vmatprep.subr.mxu0 0.0
    %114 = vmatpush1.msra.mxu0 0.0
    %115 = vmatprep.subr.mxu0 0.0
    %116 = vmatpush1.msra.mxu0 0.0
    %117 = vmatprep.subr.mxu0 0.0
    %118 = vmatpush1.msra.mxu0 0.0
    %119 = vmatprep.subr.mxu0 0.0
    %120 = vmatpush1.msra.mxu0 0.0
    %121 = vmatprep.subr.mxu0 0.0
    %122 = vmatpush1.msra.mxu0 0.0
    %123 = vmatprep.subr.mxu0 0.0
    %124 = vmatpush1.msra.mxu0 0.0
    %125 = vmatprep.subr.mxu0 0.0
    %126 = vmatpush1.msra.mxu0 0.0
    %127 = vmatprep.subr.mxu0 0.0
    %128 = vmatpush1.msra.mxu0 0.0
    %129 = vmatprep.subr.mxu0 0.0
    %130 = vmatpush1.msra.mxu0 0.0
    %131 = vmatprep.subr.mxu0 0.0
    %132 = vmatpush1.msra.mxu0 0.0
    %133 = vmatprep.subr.mxu0 0.0
    %134 = vmatpush1.msra.mxu0 0.0
    %135 = vmatprep.subr.mxu0 0.0
    %136 = vmatpush1.msra.mxu0 %v92
    %137 = vmatprep.subr.mxu0 0.0
    %138 = vmatpush1.msra.mxu0 %v91
    %139 = vmatprep.subr.mxu0 0.0
    %140 = vmatpush2.msra.mxu0 0.0
    %141 = vmatprep.subr.mxu0 0.0
    %142 = vmatpush2.msra.mxu0 0.0
    %143 = vmatprep.subr.mxu0 0.0
    %144 = vmatpush2.msra.mxu0 0.0
    %145 = vmatprep.subr.mxu0 0.0
    %146 = vmatpush2.msra.mxu0 0.0
    %147 = vmatprep.subr.mxu0 0.0
    %148 = vmatpush2.msra.mxu0 0.0
    %149 = vmatprep.subr.mxu0 0.0
    %150 = vmatpush2.msra.mxu0 0.0
    %151 = vmatprep.subr.mxu0 0.0
    %152 = vmatpush2.msra.mxu0 0.0
    %153 = vmatprep.subr.mxu0 0.0
    %154 = vmatpush2.msra.mxu0 0.0
    %155 = vmatprep.subr.mxu0 0.0
    %156 = vmatpush2.msra.mxu0 0.0
    %157 = vmatprep.subr.mxu0 0.0
    %158 = vmatpush2.msra.mxu0 0.0
    %159 = vmatprep.subr.mxu0 0.0
    %160 = vmatpush2.msra.mxu0 0.0
    %161 = vmatprep.subr.mxu0 0.0
    %162 = vmatpush2.msra.mxu0 0.0
    %163 = vmatprep.subr.mxu0 0.0
    %164 = vmatpush2.msra.mxu0 0.0
    %165 = vmatprep.subr.mxu0 0.0
    %166 = vmatpush2.msra.mxu0 0.0
    %167 = vmatprep.subr.mxu0 0.0
    %168 = vmatpush2.msra.mxu0 0.0
    %169 = vmatprep.subr.mxu0 0.0
    %170 = vmatpush2.msra.mxu0 0.0
    %171 = vmatprep.mubr.f32.mxu0 0.0
    %172 = vmatmul.mubr.f32.gmra.mxu0 %v102
    %v173 = vpop.f32.mrf.mxu0
    %v174 = vadd.f32 %v98, %v173
    %v175 = vpop.f32.mrf.mxu0
    %176 = vmatprep.mubr.f32.mxu0 0.0
    %177 = vmatmul.mubr.f32.gmra.mxu0 %v105
    %v178 = vpop.f32.mrf.mxu0
    %v179 = vadd.f32 %v98, %v178
    %v180 = vpop.f32.mrf.mxu0
    %181 = vdwg.mxu0
    %vm182 = vcmask 785408
    %183 = vst.msk [vmem:[#allocation2] sm:$0xff] %vm182, %v174
    %184 = vst.msk [vmem:[#allocation2 + $0x8] sm:$0xff] %vm182, %v179
    %v185 = vld [vmem:[#allocation9] sm:$0xff]
    %v186 = vld [vmem:[#allocation9 + $0x8] sm:$0xff]
    %187 = vmatprep.subr.mxu0 0.0
    %188 = vmatpush1.msra.mxu0 0.0
    %189 = vmatprep.subr.mxu0 0.0
    %190 = vmatpush1.msra.mxu0 0.0
    %191 = vmatprep.subr.mxu0 0.0
    %192 = vmatpush1.msra.mxu0 0.0
    %193 = vmatprep.subr.mxu0 0.0
    %194 = vmatpush1.msra.mxu0 0.0
    %195 = vmatprep.subr.mxu0 0.0
    %196 = vmatpush1.msra.mxu0 0.0
    %197 = vmatprep.subr.mxu0 0.0
    %198 = vmatpush1.msra.mxu0 0.0
    %199 = vmatprep.subr.mxu0 0.0
    %200 = vmatpush1.msra.mxu0 0.0
    %201 = vmatprep.subr.mxu0 0.0
    %202 = vmatpush1.msra.mxu0 0.0
    %203 = vmatprep.subr.mxu0 0.0
    %204 = vmatpush1.msra.mxu0 0.0
    %205 = vmatprep.subr.mxu0 0.0
    %206 = vmatpush1.msra.mxu0 0.0
    %207 = vmatprep.subr.mxu0 0.0
    %208 = vmatpush1.msra.mxu0 0.0
    %209 = vmatprep.subr.mxu0 0.0
    %210 = vmatpush1.msra.mxu0 0.0
    %211 = vmatprep.subr.mxu0 0.0
    %212 = vmatpush1.msra.mxu0 0.0
    %213 = vmatprep.subr.mxu0 0.0
    %214 = vmatpush1.msra.mxu0 0.0
    %215 = vmatprep.subr.mxu0 0.0
    %216 = vmatpush1.msra.mxu0 %v186
    %217 = vmatprep.subr.mxu0 0.0
    %218 = vmatpush1.msra.mxu0 %v185
    %219 = vmatprep.subr.mxu0 0.0
    %220 = vmatpush2.msra.mxu0 0.0
    %221 = vmatprep.subr.mxu0 0.0
    %222 = vmatpush2.msra.mxu0 0.0
    %223 = vmatprep.subr.mxu0 0.0
    %224 = vmatpush2.msra.mxu0 0.0
    %225 = vmatprep.subr.mxu0 0.0
    %226 = vmatpush2.msra.mxu0 0.0
    %227 = vmatprep.subr.mxu0 0.0
    %228 = vmatpush2.msra.mxu0 0.0
    %229 = vmatprep.subr.mxu0 0.0
    %230 = vmatpush2.msra.mxu0 0.0
    %231 = vmatprep.subr.mxu0 0.0
    %232 = vmatpush2.msra.mxu0 0.0
    %233 = vmatprep.subr.mxu0 0.0
    %234 = vmatpush2.msra.mxu0 0.0
    %235 = vmatprep.subr.mxu0 0.0
    %236 = vmatpush2.msra.mxu0 0.0
    %237 = vmatprep.subr.mxu0 0.0
    %238 = vmatpush2.msra.mxu0 0.0
    %239 = vmatprep.subr.mxu0 0.0
    %240 = vmatpush2.msra.mxu0 0.0
    %241 = vmatprep.subr.mxu0 0.0
    %242 = vmatpush2.msra.mxu0 0.0
    %243 = vmatprep.subr.mxu0 0.0
    %244 = vmatpush2.msra.mxu0 0.0
    %245 = vmatprep.subr.mxu0 0.0
    %246 = vmatpush2.msra.mxu0 0.0
    %247 = vmatprep.subr.mxu0 0.0
    %248 = vmatpush2.msra.mxu0 0.0
    %249 = vmatprep.subr.mxu0 0.0
    %250 = vmatpush2.msra.mxu0 0.0
    %251 = vmatprep.mubr.f32.mxu0 0.0
    %252 = vmatmul.mubr.f32.gmra.mxu0 %v102
    %v253 = vpop.f32.mrf.mxu0
    %v254 = vadd.f32 0.0, %v253
    %v255 = vpop.f32.mrf.mxu0
    %256 = vmatprep.mubr.f32.mxu0 0.0
    %257 = vmatmul.mubr.f32.gmra.mxu0 %v105
    %v258 = vpop.f32.mrf.mxu0
    %v259 = vadd.f32 0.0, %v258
    %v260 = vpop.f32.mrf.mxu0
    %261 = vdwg.mxu0
    %vm262 = vcmask 261120
    %263 = vst.msk [vmem:[#allocation3] sm:$0xff] %vm262, %v254
    %264 = vst.msk [vmem:[#allocation3 + $0x8] sm:$0xff] %vm262, %v259
    %v265 = vld [vmem:[#allocation10] sm:$0xff]
    %v266 = vld [vmem:[#allocation10 + $0x8] sm:$0xff]
    %v267 = vld [vmem:[#allocation10 + $0x10] sm:$0xff]
    %v268 = vld [vmem:[#allocation10 + $0x18] sm:$0xff]
    %v269 = vld [vmem:[#allocation10 + $0x20] sm:$0xff]
    %v270 = vld [vmem:[#allocation10 + $0x28] sm:$0xff]
    %v271 = vld [vmem:[#allocation10 + $0x30] sm:$0xff]
    %v272 = vld [vmem:[#allocation10 + $0x38] sm:$0xff]
    %v273 = vld [vmem:[%s5] sm:$0x1]
    %v275 = vlaneseq
    %v276 = vshrl.u32 %v275, 7
    %v277 = vsub.s32 0, %v276
    %v278 = vrot.slane %v273, %v277
    %v279 = vld [vmem:[%s6] sm:$0x3]
    %v280 = vld [vmem:[%s7] sm:$0x3]
    %v281 = vld [vmem:[#allocation2] sm:$0x3]
    %v282 = vld [vmem:[#allocation3] sm:$0x3]
    %284 = vrot.lane.b32.xlu0 %v280, 32
    %v285 = vpop.permute.xlu0 %284
    %v287 = vsel %vm262, %v279, %v285
    %vm288 = vcmask 523264
    %v290 = vsel %vm288, %v287, 0
    %292 = vmatprep.subr.mxu0 0.0
    %293 = vmatpush1.msra.mxu0 0.0
    %294 = vmatprep.subr.mxu0 0.0
    %295 = vmatpush1.msra.mxu0 0.0
    %296 = vmatprep.subr.mxu0 0.0
    %297 = vmatpush1.msra.mxu0 0.0
    %298 = vmatprep.subr.mxu0 0.0
    %299 = vmatpush1.msra.mxu0 0.0
    %300 = vmatprep.subr.mxu0 0.0
    %301 = vmatpush1.msra.mxu0 0.0
    %302 = vmatprep.subr.mxu0 0.0
    %303 = vmatpush1.msra.mxu0 0.0
    %304 = vmatprep.subr.mxu0 0.0
    %305 = vmatpush1.msra.mxu0 0.0
    %306 = vmatprep.subr.mxu0 0.0
    %307 = vmatpush1.msra.mxu0 0.0
    %308 = vmatprep.subr.mxu0 0.0
    %309 = vmatpush1.msra.mxu0 %v272
    %310 = vmatprep.subr.mxu0 0.0
    %311 = vmatpush1.msra.mxu0 %v271
    %312 = vmatprep.subr.mxu0 0.0
    %313 = vmatpush1.msra.mxu0 %v270
    %314 = vmatprep.subr.mxu0 0.0
    %315 = vmatpush1.msra.mxu0 %v269
    %316 = vmatprep.subr.mxu0 0.0
    %317 = vmatpush1.msra.mxu0 %v268
    %318 = vmatprep.subr.mxu0 0.0
    %319 = vmatpush1.msra.mxu0 %v267
    %320 = vmatprep.subr.mxu0 0.0
    %321 = vmatpush1.msra.mxu0 %v266
    %322 = vmatprep.subr.mxu0 0.0
    %323 = vmatpush1.msra.mxu0 %v265
    %324 = vmatprep.subr.mxu0 0.0
    %325 = vmatpush2.msra.mxu0 0.0
    %326 = vmatprep.subr.mxu0 0.0
    %327 = vmatpush2.msra.mxu0 0.0
    %328 = vmatprep.subr.mxu0 0.0
    %329 = vmatpush2.msra.mxu0 0.0
    %330 = vmatprep.subr.mxu0 0.0
    %331 = vmatpush2.msra.mxu0 0.0
    %332 = vmatprep.subr.mxu0 0.0
    %333 = vmatpush2.msra.mxu0 0.0
    %334 = vmatprep.subr.mxu0 0.0
    %335 = vmatpush2.msra.mxu0 0.0
    %336 = vmatprep.subr.mxu0 0.0
    %337 = vmatpush2.msra.mxu0 0.0
    %338 = vmatprep.subr.mxu0 0.0
    %339 = vmatpush2.msra.mxu0 0.0
    %340 = vmatprep.subr.mxu0 0.0
    %341 = vmatpush2.msra.mxu0 0.0
    %342 = vmatprep.subr.mxu0 0.0
    %343 = vmatpush2.msra.mxu0 0.0
    %344 = vmatprep.subr.mxu0 0.0
    %345 = vmatpush2.msra.mxu0 0.0
    %346 = vmatprep.subr.mxu0 0.0
    %347 = vmatpush2.msra.mxu0 0.0
    %348 = vmatprep.subr.mxu0 0.0
    %349 = vmatpush2.msra.mxu0 0.0
    %350 = vmatprep.subr.mxu0 0.0
    %351 = vmatpush2.msra.mxu0 0.0
    %352 = vmatprep.subr.mxu0 0.0
    %353 = vmatpush2.msra.mxu0 0.0
    %354 = vmatprep.subr.mxu0 0.0
    %355 = vmatpush2.msra.mxu0 0.0
    %356 = vmatprep.mubr.f32.mxu0 0.0
    %357 = vmatmul.mubr.f32.gmra.mxu0 %v290
    %v358 = vpop.f32.mrf.mxu0
    %v359 = vadd.f32 0.0, %v358
    %v360 = vpop.f32.mrf.mxu0
    %361 = vdwg.mxu0
    %v362 = vadd.f32 %v281, %v359
    %v363 = vxor.u32 %v362, 2147483648
    %v364 = vmul.f32 %v363, 1.442695
    %v365 = vpow.pop %v364
    %v366 = vadd.f32 %v365, 1.0
    %v367 = vrcp.pop %v366
    %v368 = vmul.f32 1.0, %v367
    %369 = vrot.lane.b32.xlu0 %v278, 96
    %v370 = vpop.permute.xlu0 %369
    %v372 = vadd.f32 %v359, %v370
    %v373 = vtanh.pop %v372
    %v374 = vmul.f32 %v368, %v285
    %376 = vrot.lane.b32.xlu0 %v373, 32
    %v377 = vpop.permute.xlu0 %376
    %v379 = vmul.f32 %v368, %v377
    %381 = vrot.lane.b32.xlu0 %v379, 32
    %v382 = vpop.permute.xlu0 %381
    %v384 = vadd.f32 %v374, %v382
    %v385 = vtanh.pop %v384
    %387 = vrot.lane.b32.xlu0 %v282, 32
    %v388 = vpop.permute.xlu0 %387
    %v390 = vadd.f32 %v385, %v388
    %392 = vrot.lane.b32.xlu0 %v390, 32
    %v393 = vpop.permute.xlu0 %392
    %v395 = vmul.f32 %v368, %v393
    %397 = vrot.lane.b32.xlu0 %v395, 64
    %v398 = vpop.permute.xlu0 %397
    %vm400 = vcmask 254976
    %401 = vst.msk [vmem:[#allocation12] sm:$0x3] %vm400, %v398
    %s402 = scalar_lea.vmem [#allocation2], 2
    %v403 = vld [vmem:[%s402] sm:$0x3]
    %s404 = scalar_lea.vmem [#allocation3], 2
    %v405 = vld [vmem:[%s404] sm:$0x3]
    %v406 = vsel %vm262, %v398, %v384
    %v408 = vsel %vm288, %v406, 0
    %410 = vmatprep.subr.mxu0 0.0
    %411 = vmatpush1.msra.mxu0 0.0
    %412 = vmatprep.subr.mxu0 0.0
    %413 = vmatpush1.msra.mxu0 0.0
    %414 = vmatprep.subr.mxu0 0.0
    %415 = vmatpush1.msra.mxu0 0.0
    %416 = vmatprep.subr.mxu0 0.0
    %417 = vmatpush1.msra.mxu0 0.0
    %418 = vmatprep.subr.mxu0 0.0
    %419 = vmatpush1.msra.mxu0 0.0
    %420 = vmatprep.subr.mxu0 0.0
    %421 = vmatpush1.msra.mxu0 0.0
    %422 = vmatprep.subr.mxu0 0.0
    %423 = vmatpush1.msra.mxu0 0.0
    %424 = vmatprep.subr.mxu0 0.0
    %425 = vmatpush1.msra.mxu0 0.0
    %426 = vmatprep.subr.mxu0 0.0
    %427 = vmatpush1.msra.mxu0 %v272
    %428 = vmatprep.subr.mxu0 0.0
    %429 = vmatpush1.msra.mxu0 %v271
    %430 = vmatprep.subr.mxu0 0.0
    %431 = vmatpush1.msra.mxu0 %v270
    %432 = vmatprep.subr.mxu0 0.0
    %433 = vmatpush1.msra.mxu0 %v269
    %434 = vmatprep.subr.mxu0 0.0
    %435 = vmatpush1.msra.mxu0 %v268
    %436 = vmatprep.subr.mxu0 0.0
    %437 = vmatpush1.msra.mxu0 %v267
    %438 = vmatprep.subr.mxu0 0.0
    %439 = vmatpush1.msra.mxu0 %v266
    %440 = vmatprep.subr.mxu0 0.0
    %441 = vmatpush1.msra.mxu0 %v265
    %442 = vmatprep.subr.mxu0 0.0
    %443 = vmatpush2.msra.mxu0 0.0
    %444 = vmatprep.subr.mxu0 0.0
    %445 = vmatpush2.msra.mxu0 0.0
    %446 = vmatprep.subr.mxu0 0.0
    %447 = vmatpush2.msra.mxu0 0.0
    %448 = vmatprep.subr.mxu0 0.0
    %449 = vmatpush2.msra.mxu0 0.0
    %450 = vmatprep.subr.mxu0 0.0
    %451 = vmatpush2.msra.mxu0 0.0
    %452 = vmatprep.subr.mxu0 0.0
    %453 = vmatpush2.msra.mxu0 0.0
    %454 = vmatprep.subr.mxu0 0.0
    %455 = vmatpush2.msra.mxu0 0.0
    %456 = vmatprep.subr.mxu0 0.0
    %457 = vmatpush2.msra.mxu0 0.0
    %458 = vmatprep.subr.mxu0 0.0
    %459 = vmatpush2.msra.mxu0 0.0
    %460 = vmatprep.subr.mxu0 0.0
    %461 = vmatpush2.msra.mxu0 0.0
    %462 = vmatprep.subr.mxu0 0.0
    %463 = vmatpush2.msra.mxu0 0.0
    %464 = vmatprep.subr.mxu0 0.0
    %465 = vmatpush2.msra.mxu0 0.0
    %466 = vmatprep.subr.mxu0 0.0
    %467 = vmatpush2.msra.mxu0 0.0
    %468 = vmatprep.subr.mxu0 0.0
    %469 = vmatpush2.msra.mxu0 0.0
    %470 = vmatprep.subr.mxu0 0.0
    %471 = vmatpush2.msra.mxu0 0.0
    %472 = vmatprep.subr.mxu0 0.0
    %473 = vmatpush2.msra.mxu0 0.0
    %474 = vmatprep.mubr.f32.mxu0 0.0
    %475 = vmatmul.mubr.f32.gmra.mxu0 %v408
    %v476 = vpop.f32.mrf.mxu0
    %v477 = vadd.f32 0.0, %v476
    %v478 = vpop.f32.mrf.mxu0
    %479 = vdwg.mxu0
    %v480 = vadd.f32 %v403, %v477
    %v481 = vxor.u32 %v480, 2147483648
    %v482 = vmul.f32 %v481, 1.442695
    %v483 = vpow.pop %v482
    %v484 = vadd.f32 %v483, 1.0
    %v485 = vrcp.pop %v484
    %v486 = vmul.f32 1.0, %v485
    %v487 = vadd.f32 %v477, %v370
    %v488 = vtanh.pop %v487
    %v489 = vmul.f32 %v486, %v384
    %491 = vrot.lane.b32.xlu0 %v488, 32
    %v492 = vpop.permute.xlu0 %491
    %v494 = vmul.f32 %v486, %v492
    %496 = vrot.lane.b32.xlu0 %v494, 32
    %v497 = vpop.permute.xlu0 %496
    %v499 = vadd.f32 %v489, %v497
    %v500 = vtanh.pop %v499
    %502 = vrot.lane.b32.xlu0 %v405, 32
    %v503 = vpop.permute.xlu0 %502
    %v505 = vadd.f32 %v500, %v503
    %507 = vrot.lane.b32.xlu0 %v505, 32
    %v508 = vpop.permute.xlu0 %507
    %v510 = vmul.f32 %v486, %v508
    %512 = vrot.lane.b32.xlu0 %v510, 64
    %v513 = vpop.permute.xlu0 %512
    %s515 = scalar_lea.vmem [#allocation12], 2
    %516 = vst.msk [vmem:[%s515] sm:$0x3] %vm400, %v513
    %s517 = scalar_lea.vmem [#allocation2], 4
    %v518 = vld [vmem:[%s517] sm:$0x3]
    %s519 = scalar_lea.vmem [#allocation3], 4
    %v520 = vld [vmem:[%s519] sm:$0x3]
    %v521 = vsel %vm262, %v513, %v499
    %v523 = vsel %vm288, %v521, 0
    %525 = vmatprep.subr.mxu0 0.0
    %526 = vmatpush1.msra.mxu0 0.0
    %527 = vmatprep.subr.mxu0 0.0
    %528 = vmatpush1.msra.mxu0 0.0
    %529 = vmatprep.subr.mxu0 0.0
    %530 = vmatpush1.msra.mxu0 0.0
    %531 = vmatprep.subr.mxu0 0.0
    %532 = vmatpush1.msra.mxu0 0.0
    %533 = vmatprep.subr.mxu0 0.0
    %534 = vmatpush1.msra.mxu0 0.0
    %535 = vmatprep.subr.mxu0 0.0
    %536 = vmatpush1.msra.mxu0 0.0
    %537 = vmatprep.subr.mxu0 0.0
    %538 = vmatpush1.msra.mxu0 0.0
    %539 = vmatprep.subr.mxu0 0.0
    %540 = vmatpush1.msra.mxu0 0.0
    %541 = vmatprep.subr.mxu0 0.0
    %542 = vmatpush1.msra.mxu0 %v272
    %543 = vmatprep.subr.mxu0 0.0
    %544 = vmatpush1.msra.mxu0 %v271
    %545 = vmatprep.subr.mxu0 0.0
    %546 = vmatpush1.msra.mxu0 %v270
    %547 = vmatprep.subr.mxu0 0.0
    %548 = vmatpush1.msra.mxu0 %v269
    %549 = vmatprep.subr.mxu0 0.0
    %550 = vmatpush1.msra.mxu0 %v268
    %551 = vmatprep.subr.mxu0 0.0
    %552 = vmatpush1.msra.mxu0 %v267
    %553 = vmatprep.subr.mxu0 0.0
    %554 = vmatpush1.msra.mxu0 %v266
    %555 = vmatprep.subr.mxu0 0.0
    %556 = vmatpush1.msra.mxu0 %v265
    %557 = vmatprep.subr.mxu0 0.0
    %558 = vmatpush2.msra.mxu0 0.0
    %559 = vmatprep.subr.mxu0 0.0
    %560 = vmatpush2.msra.mxu0 0.0
    %561 = vmatprep.subr.mxu0 0.0
    %562 = vmatpush2.msra.mxu0 0.0
    %563 = vmatprep.subr.mxu0 0.0
    %564 = vmatpush2.msra.mxu0 0.0
    %565 = vmatprep.subr.mxu0 0.0
    %566 = vmatpush2.msra.mxu0 0.0
    %567 = vmatprep.subr.mxu0 0.0
    %568 = vmatpush2.msra.mxu0 0.0
    %569 = vmatprep.subr.mxu0 0.0
    %570 = vmatpush2.msra.mxu0 0.0
    %571 = vmatprep.subr.mxu0 0.0
    %572 = vmatpush2.msra.mxu0 0.0
    %573 = vmatprep.subr.mxu0 0.0
    %574 = vmatpush2.msra.mxu0 0.0
    %575 = vmatprep.subr.mxu0 0.0
    %576 = vmatpush2.msra.mxu0 0.0
    %577 = vmatprep.subr.mxu0 0.0
    %578 = vmatpush2.msra.mxu0 0.0
    %579 = vmatprep.subr.mxu0 0.0
    %580 = vmatpush2.msra.mxu0 0.0
    %581 = vmatprep.subr.mxu0 0.0
    %582 = vmatpush2.msra.mxu0 0.0
    %583 = vmatprep.subr.mxu0 0.0
    %584 = vmatpush2.msra.mxu0 0.0
    %585 = vmatprep.subr.mxu0 0.0
    %586 = vmatpush2.msra.mxu0 0.0
    %587 = vmatprep.subr.mxu0 0.0
    %588 = vmatpush2.msra.mxu0 0.0
    %589 = vmatprep.mubr.f32.mxu0 0.0
    %590 = vmatmul.mubr.f32.gmra.mxu0 %v523
    %v591 = vpop.f32.mrf.mxu0
    %v592 = vadd.f32 0.0, %v591
    %v593 = vpop.f32.mrf.mxu0
    %594 = vdwg.mxu0
    %v595 = vadd.f32 %v518, %v592
    %v596 = vxor.u32 %v595, 2147483648
    %v597 = vmul.f32 %v596, 1.442695
    %v598 = vpow.pop %v597
    %v599 = vadd.f32 %v598, 1.0
    %v600 = vrcp.pop %v599
    %v601 = vmul.f32 1.0, %v600
    %v602 = vadd.f32 %v592, %v370
    %v603 = vtanh.pop %v602
    %v604 = vmul.f32 %v601, %v499
    %606 = vrot.lane.b32.xlu0 %v603, 32
    %v607 = vpop.permute.xlu0 %606
    %v609 = vmul.f32 %v601, %v607
    %611 = vrot.lane.b32.xlu0 %v609, 32
    %v612 = vpop.permute.xlu0 %611
    %v614 = vadd.f32 %v604, %v612
    %v615 = vtanh.pop %v614
    %617 = vrot.lane.b32.xlu0 %v520, 32
    %v618 = vpop.permute.xlu0 %617
    %v620 = vadd.f32 %v615, %v618
    %622 = vrot.lane.b32.xlu0 %v620, 32
    %v623 = vpop.permute.xlu0 %622
    %v625 = vmul.f32 %v601, %v623
    %627 = vrot.lane.b32.xlu0 %v625, 64
    %v628 = vpop.permute.xlu0 %627
    %s630 = scalar_lea.vmem [#allocation12], 4
    %631 = vst.msk [vmem:[%s630] sm:$0x3] %vm400, %v628
    %s632 = scalar_lea.vmem [#allocation2], 6
    %v633 = vld [vmem:[%s632] sm:$0x3]
    %s634 = scalar_lea.vmem [#allocation3], 6
    %v635 = vld [vmem:[%s634] sm:$0x3]
    %v636 = vsel %vm262, %v628, %v614
    %v638 = vsel %vm288, %v636, 0
    %640 = vmatprep.subr.mxu0 0.0
    %641 = vmatpush1.msra.mxu0 0.0
    %642 = vmatprep.subr.mxu0 0.0
    %643 = vmatpush1.msra.mxu0 0.0
    %644 = vmatprep.subr.mxu0 0.0
    %645 = vmatpush1.msra.mxu0 0.0
    %646 = vmatprep.subr.mxu0 0.0
    %647 = vmatpush1.msra.mxu0 0.0
    %648 = vmatprep.subr.mxu0 0.0
    %649 = vmatpush1.msra.mxu0 0.0
    %650 = vmatprep.subr.mxu0 0.0
    %651 = vmatpush1.msra.mxu0 0.0
    %652 = vmatprep.subr.mxu0 0.0
    %653 = vmatpush1.msra.mxu0 0.0
    %654 = vmatprep.subr.mxu0 0.0
    %655 = vmatpush1.msra.mxu0 0.0
    %656 = vmatprep.subr.mxu0 0.0
    %657 = vmatpush1.msra.mxu0 %v272
    %658 = vmatprep.subr.mxu0 0.0
    %659 = vmatpush1.msra.mxu0 %v271
    %660 = vmatprep.subr.mxu0 0.0
    %661 = vmatpush1.msra.mxu0 %v270
    %662 = vmatprep.subr.mxu0 0.0
    %663 = vmatpush1.msra.mxu0 %v269
    %664 = vmatprep.subr.mxu0 0.0
    %665 = vmatpush1.msra.mxu0 %v268
    %666 = vmatprep.subr.mxu0 0.0
    %667 = vmatpush1.msra.mxu0 %v267
    %668 = vmatprep.subr.mxu0 0.0
    %669 = vmatpush1.msra.mxu0 %v266
    %670 = vmatprep.subr.mxu0 0.0
    %671 = vmatpush1.msra.mxu0 %v265
    %672 = vmatprep.subr.mxu0 0.0
    %673 = vmatpush2.msra.mxu0 0.0
    %674 = vmatprep.subr.mxu0 0.0
    %675 = vmatpush2.msra.mxu0 0.0
    %676 = vmatprep.subr.mxu0 0.0
    %677 = vmatpush2.msra.mxu0 0.0
    %678 = vmatprep.subr.mxu0 0.0
    %679 = vmatpush2.msra.mxu0 0.0
    %680 = vmatprep.subr.mxu0 0.0
    %681 = vmatpush2.msra.mxu0 0.0
    %682 = vmatprep.subr.mxu0 0.0
    %683 = vmatpush2.msra.mxu0 0.0
    %684 = vmatprep.subr.mxu0 0.0
    %685 = vmatpush2.msra.mxu0 0.0
    %686 = vmatprep.subr.mxu0 0.0
    %687 = vmatpush2.msra.mxu0 0.0
    %688 = vmatprep.subr.mxu0 0.0
    %689 = vmatpush2.msra.mxu0 0.0
    %690 = vmatprep.subr.mxu0 0.0
    %691 = vmatpush2.msra.mxu0 0.0
    %692 = vmatprep.subr.mxu0 0.0
    %693 = vmatpush2.msra.mxu0 0.0
    %694 = vmatprep.subr.mxu0 0.0
    %695 = vmatpush2.msra.mxu0 0.0
    %696 = vmatprep.subr.mxu0 0.0
    %697 = vmatpush2.msra.mxu0 0.0
    %698 = vmatprep.subr.mxu0 0.0
    %699 = vmatpush2.msra.mxu0 0.0
    %700 = vmatprep.subr.mxu0 0.0
    %701 = vmatpush2.msra.mxu0 0.0
    %702 = vmatprep.subr.mxu0 0.0
    %703 = vmatpush2.msra.mxu0 0.0
    %704 = vmatprep.mubr.f32.mxu0 0.0
    %705 = vmatmul.mubr.f32.gmra.mxu0 %v638
    %v706 = vpop.f32.mrf.mxu0
    %v707 = vadd.f32 0.0, %v706
    %v708 = vpop.f32.mrf.mxu0
    %709 = vdwg.mxu0
    %v710 = vadd.f32 %v633, %v707
    %v711 = vxor.u32 %v710, 2147483648
    %v712 = vmul.f32 %v711, 1.442695
    %v713 = vpow.pop %v712
    %v714 = vadd.f32 %v713, 1.0
    %v715 = vrcp.pop %v714
    %v716 = vmul.f32 1.0, %v715
    %v717 = vadd.f32 %v707, %v370
    %v718 = vtanh.pop %v717
    %v719 = vmul.f32 %v716, %v614
    %721 = vrot.lane.b32.xlu0 %v718, 32
    %v722 = vpop.permute.xlu0 %721
    %v724 = vmul.f32 %v716, %v722
    %726 = vrot.lane.b32.xlu0 %v724, 32
    %v727 = vpop.permute.xlu0 %726
    %v729 = vadd.f32 %v719, %v727
    %v730 = vtanh.pop %v729
    %732 = vrot.lane.b32.xlu0 %v635, 32
    %v733 = vpop.permute.xlu0 %732
    %v735 = vadd.f32 %v730, %v733
    %737 = vrot.lane.b32.xlu0 %v735, 32
    %v738 = vpop.permute.xlu0 %737
    %v740 = vmul.f32 %v716, %v738
    %742 = vrot.lane.b32.xlu0 %v740, 64
    %v743 = vpop.permute.xlu0 %742
    %s745 = scalar_lea.vmem [#allocation12], 6
    %746 = vst.msk [vmem:[%s745] sm:$0x3] %vm400, %v743
    %s747 = scalar_lea.vmem [#allocation2], 8
    %v748 = vld [vmem:[%s747] sm:$0x3]
    %s749 = scalar_lea.vmem [#allocation3], 8
    %v750 = vld [vmem:[%s749] sm:$0x3]
    %v751 = vsel %vm262, %v743, %v729
    %v753 = vsel %vm288, %v751, 0
    %755 = vmatprep.subr.mxu0 0.0
    %756 = vmatpush1.msra.mxu0 0.0
    %757 = vmatprep.subr.mxu0 0.0
    %758 = vmatpush1.msra.mxu0 0.0
    %759 = vmatprep.subr.mxu0 0.0
    %760 = vmatpush1.msra.mxu0 0.0
    %761 = vmatprep.subr.mxu0 0.0
    %762 = vmatpush1.msra.mxu0 0.0
    %763 = vmatprep.subr.mxu0 0.0
    %764 = vmatpush1.msra.mxu0 0.0
    %765 = vmatprep.subr.mxu0 0.0
    %766 = vmatpush1.msra.mxu0 0.0
    %767 = vmatprep.subr.mxu0 0.0
    %768 = vmatpush1.msra.mxu0 0.0
    %769 = vmatprep.subr.mxu0 0.0
    %770 = vmatpush1.msra.mxu0 0.0
    %771 = vmatprep.subr.mxu0 0.0
    %772 = vmatpush1.msra.mxu0 %v272
    %773 = vmatprep.subr.mxu0 0.0
    %774 = vmatpush1.msra.mxu0 %v271
    %775 = vmatprep.subr.mxu0 0.0
    %776 = vmatpush1.msra.mxu0 %v270
    %777 = vmatprep.subr.mxu0 0.0
    %778 = vmatpush1.msra.mxu0 %v269
    %779 = vmatprep.subr.mxu0 0.0
    %780 = vmatpush1.msra.mxu0 %v268
    %781 = vmatprep.subr.mxu0 0.0
    %782 = vmatpush1.msra.mxu0 %v267
    %783 = vmatprep.subr.mxu0 0.0
    %784 = vmatpush1.msra.mxu0 %v266
    %785 = vmatprep.subr.mxu0 0.0
    %786 = vmatpush1.msra.mxu0 %v265
    %787 = vmatprep.subr.mxu0 0.0
    %788 = vmatpush2.msra.mxu0 0.0
    %789 = vmatprep.subr.mxu0 0.0
    %790 = vmatpush2.msra.mxu0 0.0
    %791 = vmatprep.subr.mxu0 0.0
    %792 = vmatpush2.msra.mxu0 0.0
    %793 = vmatprep.subr.mxu0 0.0
    %794 = vmatpush2.msra.mxu0 0.0
    %795 = vmatprep.subr.mxu0 0.0
    %796 = vmatpush2.msra.mxu0 0.0
    %797 = vmatprep.subr.mxu0 0.0
    %798 = vmatpush2.msra.mxu0 0.0
    %799 = vmatprep.subr.mxu0 0.0
    %800 = vmatpush2.msra.mxu0 0.0
    %801 = vmatprep.subr.mxu0 0.0
    %802 = vmatpush2.msra.mxu0 0.0
    %803 = vmatprep.subr.mxu0 0.0
    %804 = vmatpush2.msra.mxu0 0.0
    %805 = vmatprep.subr.mxu0 0.0
    %806 = vmatpush2.msra.mxu0 0.0
    %807 = vmatprep.subr.mxu0 0.0
    %808 = vmatpush2.msra.mxu0 0.0
    %809 = vmatprep.subr.mxu0 0.0
    %810 = vmatpush2.msra.mxu0 0.0
    %811 = vmatprep.subr.mxu0 0.0
    %812 = vmatpush2.msra.mxu0 0.0
    %813 = vmatprep.subr.mxu0 0.0
    %814 = vmatpush2.msra.mxu0 0.0
    %815 = vmatprep.subr.mxu0 0.0
    %816 = vmatpush2.msra.mxu0 0.0
    %817 = vmatprep.subr.mxu0 0.0
    %818 = vmatpush2.msra.mxu0 0.0
    %819 = vmatprep.mubr.f32.mxu0 0.0
    %820 = vmatmul.mubr.f32.gmra.mxu0 %v753
    %v821 = vpop.f32.mrf.mxu0
    %v822 = vadd.f32 0.0, %v821
    %v823 = vpop.f32.mrf.mxu0
    %824 = vdwg.mxu0
    %v825 = vadd.f32 %v748, %v822
    %v826 = vxor.u32 %v825, 2147483648
    %v827 = vmul.f32 %v826, 1.442695
    %v828 = vpow.pop %v827
    %v829 = vadd.f32 %v828, 1.0
    %v830 = vrcp.pop %v829
    %v831 = vmul.f32 1.0, %v830
    %v832 = vadd.f32 %v822, %v370
    %v833 = vtanh.pop %v832
    %v834 = vmul.f32 %v831, %v729
    %836 = vrot.lane.b32.xlu0 %v833, 32
    %v837 = vpop.permute.xlu0 %836
    %v839 = vmul.f32 %v831, %v837
    %841 = vrot.lane.b32.xlu0 %v839, 32
    %v842 = vpop.permute.xlu0 %841
    %v844 = vadd.f32 %v834, %v842
    %v845 = vtanh.pop %v844
    %847 = vrot.lane.b32.xlu0 %v750, 32
    %v848 = vpop.permute.xlu0 %847
    %v850 = vadd.f32 %v845, %v848
    %852 = vrot.lane.b32.xlu0 %v850, 32
    %v853 = vpop.permute.xlu0 %852
    %v855 = vmul.f32 %v831, %v853
    %857 = vrot.lane.b32.xlu0 %v855, 64
    %v858 = vpop.permute.xlu0 %857
    %s860 = scalar_lea.vmem [#allocation12], 8
    %861 = vst.msk [vmem:[%s860] sm:$0x3] %vm400, %v858
    %s862 = scalar_lea.vmem [#allocation2], 10
    %v863 = vld [vmem:[%s862] sm:$0x3]
    %s864 = scalar_lea.vmem [#allocation3], 10
    %v865 = vld [vmem:[%s864] sm:$0x3]
    %v866 = vsel %vm262, %v858, %v844
    %v868 = vsel %vm288, %v866, 0
    %870 = vmatprep.subr.mxu0 0.0
    %871 = vmatpush1.msra.mxu0 0.0
    %872 = vmatprep.subr.mxu0 0.0
    %873 = vmatpush1.msra.mxu0 0.0
    %874 = vmatprep.subr.mxu0 0.0
    %875 = vmatpush1.msra.mxu0 0.0
    %876 = vmatprep.subr.mxu0 0.0
    %877 = vmatpush1.msra.mxu0 0.0
    %878 = vmatprep.subr.mxu0 0.0
    %879 = vmatpush1.msra.mxu0 0.0
    %880 = vmatprep.subr.mxu0 0.0
    %881 = vmatpush1.msra.mxu0 0.0
    %882 = vmatprep.subr.mxu0 0.0
    %883 = vmatpush1.msra.mxu0 0.0
    %884 = vmatprep.subr.mxu0 0.0
    %885 = vmatpush1.msra.mxu0 0.0
    %886 = vmatprep.subr.mxu0 0.0
    %887 = vmatpush1.msra.mxu0 %v272
    %888 = vmatprep.subr.mxu0 0.0
    %889 = vmatpush1.msra.mxu0 %v271
    %890 = vmatprep.subr.mxu0 0.0
    %891 = vmatpush1.msra.mxu0 %v270
    %892 = vmatprep.subr.mxu0 0.0
    %893 = vmatpush1.msra.mxu0 %v269
    %894 = vmatprep.subr.mxu0 0.0
    %895 = vmatpush1.msra.mxu0 %v268
    %896 = vmatprep.subr.mxu0 0.0
    %897 = vmatpush1.msra.mxu0 %v267
    %898 = vmatprep.subr.mxu0 0.0
    %899 = vmatpush1.msra.mxu0 %v266
    %900 = vmatprep.subr.mxu0 0.0
    %901 = vmatpush1.msra.mxu0 %v265
    %902 = vmatprep.subr.mxu0 0.0
    %903 = vmatpush2.msra.mxu0 0.0
    %904 = vmatprep.subr.mxu0 0.0
    %905 = vmatpush2.msra.mxu0 0.0
    %906 = vmatprep.subr.mxu0 0.0
    %907 = vmatpush2.msra.mxu0 0.0
    %908 = vmatprep.subr.mxu0 0.0
    %909 = vmatpush2.msra.mxu0 0.0
    %910 = vmatprep.subr.mxu0 0.0
    %911 = vmatpush2.msra.mxu0 0.0
    %912 = vmatprep.subr.mxu0 0.0
    %913 = vmatpush2.msra.mxu0 0.0
    %914 = vmatprep.subr.mxu0 0.0
    %915 = vmatpush2.msra.mxu0 0.0
    %916 = vmatprep.subr.mxu0 0.0
    %917 = vmatpush2.msra.mxu0 0.0
    %918 = vmatprep.subr.mxu0 0.0
    %919 = vmatpush2.msra.mxu0 0.0
    %920 = vmatprep.subr.mxu0 0.0
    %921 = vmatpush2.msra.mxu0 0.0
    %922 = vmatprep.subr.mxu0 0.0
    %923 = vmatpush2.msra.mxu0 0.0
    %924 = vmatprep.subr.mxu0 0.0
    %925 = vmatpush2.msra.mxu0 0.0
    %926 = vmatprep.subr.mxu0 0.0
    %927 = vmatpush2.msra.mxu0 0.0
    %928 = vmatprep.subr.mxu0 0.0
    %929 = vmatpush2.msra.mxu0 0.0
    %930 = vmatprep.subr.mxu0 0.0
    %931 = vmatpush2.msra.mxu0 0.0
    %932 = vmatprep.subr.mxu0 0.0
    %933 = vmatpush2.msra.mxu0 0.0
    %934 = vmatprep.mubr.f32.mxu0 0.0
    %935 = vmatmul.mubr.f32.gmra.mxu0 %v868
    %v936 = vpop.f32.mrf.mxu0
    %v937 = vadd.f32 0.0, %v936
    %v938 = vpop.f32.mrf.mxu0
    %939 = vdwg.mxu0
    %v940 = vadd.f32 %v863, %v937
    %v941 = vxor.u32 %v940, 2147483648
    %v942 = vmul.f32 %v941, 1.442695
    %v943 = vpow.pop %v942
    %v944 = vadd.f32 %v943, 1.0
    %v945 = vrcp.pop %v944
    %v946 = vmul.f32 1.0, %v945
    %v947 = vadd.f32 %v937, %v370
    %v948 = vtanh.pop %v947
    %v949 = vmul.f32 %v946, %v844
    %951 = vrot.lane.b32.xlu0 %v948, 32
    %v952 = vpop.permute.xlu0 %951
    %v954 = vmul.f32 %v946, %v952
    %956 = vrot.lane.b32.xlu0 %v954, 32
    %v957 = vpop.permute.xlu0 %956
    %v959 = vadd.f32 %v949, %v957
    %v960 = vtanh.pop %v959
    %962 = vrot.lane.b32.xlu0 %v865, 32
    %v963 = vpop.permute.xlu0 %962
    %v965 = vadd.f32 %v960, %v963
    %967 = vrot.lane.b32.xlu0 %v965, 32
    %v968 = vpop.permute.xlu0 %967
    %v970 = vmul.f32 %v946, %v968
    %972 = vrot.lane.b32.xlu0 %v970, 64
    %v973 = vpop.permute.xlu0 %972
    %s975 = scalar_lea.vmem [#allocation12], 10
    %976 = vst.msk [vmem:[%s975] sm:$0x3] %vm400, %v973
    %s977 = scalar_lea.vmem [#allocation2], 12
    %v978 = vld [vmem:[%s977] sm:$0x3]
    %s979 = scalar_lea.vmem [#allocation3], 12
    %v980 = vld [vmem:[%s979] sm:$0x3]
    %v981 = vsel %vm262, %v973, %v959
    %v983 = vsel %vm288, %v981, 0
    %985 = vmatprep.subr.mxu0 0.0
    %986 = vmatpush1.msra.mxu0 0.0
    %987 = vmatprep.subr.mxu0 0.0
    %988 = vmatpush1.msra.mxu0 0.0
    %989 = vmatprep.subr.mxu0 0.0
    %990 = vmatpush1.msra.mxu0 0.0
    %991 = vmatprep.subr.mxu0 0.0
    %992 = vmatpush1.msra.mxu0 0.0
    %993 = vmatprep.subr.mxu0 0.0
    %994 = vmatpush1.msra.mxu0 0.0
    %995 = vmatprep.subr.mxu0 0.0
    %996 = vmatpush1.msra.mxu0 0.0
    %997 = vmatprep.subr.mxu0 0.0
    %998 = vmatpush1.msra.mxu0 0.0
    %999 = vmatprep.subr.mxu0 0.0
    %1000 = vmatpush1.msra.mxu0 0.0
    %1001 = vmatprep.subr.mxu0 0.0
    %1002 = vmatpush1.msra.mxu0 %v272
    %1003 = vmatprep.subr.mxu0 0.0
    %1004 = vmatpush1.msra.mxu0 %v271
    %1005 = vmatprep.subr.mxu0 0.0
    %1006 = vmatpush1.msra.mxu0 %v270
    %1007 = vmatprep.subr.mxu0 0.0
    %1008 = vmatpush1.msra.mxu0 %v269
    %1009 = vmatprep.subr.mxu0 0.0
    %1010 = vmatpush1.msra.mxu0 %v268
    %1011 = vmatprep.subr.mxu0 0.0
    %1012 = vmatpush1.msra.mxu0 %v267
    %1013 = vmatprep.subr.mxu0 0.0
    %1014 = vmatpush1.msra.mxu0 %v266
    %1015 = vmatprep.subr.mxu0 0.0
    %1016 = vmatpush1.msra.mxu0 %v265
    %1017 = vmatprep.subr.mxu0 0.0
    %1018 = vmatpush2.msra.mxu0 0.0
    %1019 = vmatprep.subr.mxu0 0.0
    %1020 = vmatpush2.msra.mxu0 0.0
    %1021 = vmatprep.subr.mxu0 0.0
    %1022 = vmatpush2.msra.mxu0 0.0
    %1023 = vmatprep.subr.mxu0 0.0
    %1024 = vmatpush2.msra.mxu0 0.0
    %1025 = vmatprep.subr.mxu0 0.0
    %1026 = vmatpush2.msra.mxu0 0.0
    %1027 = vmatprep.subr.mxu0 0.0
    %1028 = vmatpush2.msra.mxu0 0.0
    %1029 = vmatprep.subr.mxu0 0.0
    %1030 = vmatpush2.msra.mxu0 0.0
    %1031 = vmatprep.subr.mxu0 0.0
    %1032 = vmatpush2.msra.mxu0 0.0
    %1033 = vmatprep.subr.mxu0 0.0
    %1034 = vmatpush2.msra.mxu0 0.0
    %1035 = vmatprep.subr.mxu0 0.0
    %1036 = vmatpush2.msra.mxu0 0.0
    %1037 = vmatprep.subr.mxu0 0.0
    %1038 = vmatpush2.msra.mxu0 0.0
    %1039 = vmatprep.subr.mxu0 0.0
    %1040 = vmatpush2.msra.mxu0 0.0
    %1041 = vmatprep.subr.mxu0 0.0
    %1042 = vmatpush2.msra.mxu0 0.0
    %1043 = vmatprep.subr.mxu0 0.0
    %1044 = vmatpush2.msra.mxu0 0.0
    %1045 = vmatprep.subr.mxu0 0.0
    %1046 = vmatpush2.msra.mxu0 0.0
    %1047 = vmatprep.subr.mxu0 0.0
    %1048 = vmatpush2.msra.mxu0 0.0
    %1049 = vmatprep.mubr.f32.mxu0 0.0
    %1050 = vmatmul.mubr.f32.gmra.mxu0 %v983
    %v1051 = vpop.f32.mrf.mxu0
    %v1052 = vadd.f32 0.0, %v1051
    %v1053 = vpop.f32.mrf.mxu0
    %1054 = vdwg.mxu0
    %v1055 = vadd.f32 %v978, %v1052
    %v1056 = vxor.u32 %v1055, 2147483648
    %v1057 = vmul.f32 %v1056, 1.442695
    %v1058 = vpow.pop %v1057
    %v1059 = vadd.f32 %v1058, 1.0
    %v1060 = vrcp.pop %v1059
    %v1061 = vmul.f32 1.0, %v1060
    %v1062 = vadd.f32 %v1052, %v370
    %v1063 = vtanh.pop %v1062
    %v1064 = vmul.f32 %v1061, %v959
    %1066 = vrot.lane.b32.xlu0 %v1063, 32
    %v1067 = vpop.permute.xlu0 %1066
    %v1069 = vmul.f32 %v1061, %v1067
    %1071 = vrot.lane.b32.xlu0 %v1069, 32
    %v1072 = vpop.permute.xlu0 %1071
    %v1074 = vadd.f32 %v1064, %v1072
    %v1075 = vtanh.pop %v1074
    %1077 = vrot.lane.b32.xlu0 %v980, 32
    %v1078 = vpop.permute.xlu0 %1077
    %v1080 = vadd.f32 %v1075, %v1078
    %1082 = vrot.lane.b32.xlu0 %v1080, 32
    %v1083 = vpop.permute.xlu0 %1082
    %v1085 = vmul.f32 %v1061, %v1083
    %1087 = vrot.lane.b32.xlu0 %v1085, 64
    %v1088 = vpop.permute.xlu0 %1087
    %s1090 = scalar_lea.vmem [#allocation12], 12
    %1091 = vst.msk [vmem:[%s1090] sm:$0x3] %vm400, %v1088
    %s1092 = scalar_lea.vmem [#allocation2], 14
    %v1093 = vld [vmem:[%s1092] sm:$0x3]
    %s1094 = scalar_lea.vmem [#allocation3], 14
    %v1095 = vld [vmem:[%s1094] sm:$0x3]
    %v1096 = vsel %vm262, %v1088, %v1074
    %v1098 = vsel %vm288, %v1096, 0
    %1100 = vmatprep.subr.mxu0 0.0
    %1101 = vmatpush1.msra.mxu0 0.0
    %1102 = vmatprep.subr.mxu0 0.0
    %1103 = vmatpush1.msra.mxu0 0.0
    %1104 = vmatprep.subr.mxu0 0.0
    %1105 = vmatpush1.msra.mxu0 0.0
    %1106 = vmatprep.subr.mxu0 0.0
    %1107 = vmatpush1.msra.mxu0 0.0
    %1108 = vmatprep.subr.mxu0 0.0
    %1109 = vmatpush1.msra.mxu0 0.0
    %1110 = vmatprep.subr.mxu0 0.0
    %1111 = vmatpush1.msra.mxu0 0.0
    %1112 = vmatprep.subr.mxu0 0.0
    %1113 = vmatpush1.msra.mxu0 0.0
    %1114 = vmatprep.subr.mxu0 0.0
    %1115 = vmatpush1.msra.mxu0 0.0
    %1116 = vmatprep.subr.mxu0 0.0
    %1117 = vmatpush1.msra.mxu0 %v272
    %1118 = vmatprep.subr.mxu0 0.0
    %1119 = vmatpush1.msra.mxu0 %v271
    %1120 = vmatprep.subr.mxu0 0.0
    %1121 = vmatpush1.msra.mxu0 %v270
    %1122 = vmatprep.subr.mxu0 0.0
    %1123 = vmatpush1.msra.mxu0 %v269
    %1124 = vmatprep.subr.mxu0 0.0
    %1125 = vmatpush1.msra.mxu0 %v268
    %1126 = vmatprep.subr.mxu0 0.0
    %1127 = vmatpush1.msra.mxu0 %v267
    %1128 = vmatprep.subr.mxu0 0.0
    %1129 = vmatpush1.msra.mxu0 %v266
    %1130 = vmatprep.subr.mxu0 0.0
    %1131 = vmatpush1.msra.mxu0 %v265
    %1132 = vmatprep.subr.mxu0 0.0
    %1133 = vmatpush2.msra.mxu0 0.0
    %1134 = vmatprep.subr.mxu0 0.0
    %1135 = vmatpush2.msra.mxu0 0.0
    %1136 = vmatprep.subr.mxu0 0.0
    %1137 = vmatpush2.msra.mxu0 0.0
    %1138 = vmatprep.subr.mxu0 0.0
    %1139 = vmatpush2.msra.mxu0 0.0
    %1140 = vmatprep.subr.mxu0 0.0
    %1141 = vmatpush2.msra.mxu0 0.0
    %1142 = vmatprep.subr.mxu0 0.0
    %1143 = vmatpush2.msra.mxu0 0.0
    %1144 = vmatprep.subr.mxu0 0.0
    %1145 = vmatpush2.msra.mxu0 0.0
    %1146 = vmatprep.subr.mxu0 0.0
    %1147 = vmatpush2.msra.mxu0 0.0
    %1148 = vmatprep.subr.mxu0 0.0
    %1149 = vmatpush2.msra.mxu0 0.0
    %1150 = vmatprep.subr.mxu0 0.0
    %1151 = vmatpush2.msra.mxu0 0.0
    %1152 = vmatprep.subr.mxu0 0.0
    %1153 = vmatpush2.msra.mxu0 0.0
    %1154 = vmatprep.subr.mxu0 0.0
    %1155 = vmatpush2.msra.mxu0 0.0
    %1156 = vmatprep.subr.mxu0 0.0
    %1157 = vmatpush2.msra.mxu0 0.0
    %1158 = vmatprep.subr.mxu0 0.0
    %1159 = vmatpush2.msra.mxu0 0.0
    %1160 = vmatprep.subr.mxu0 0.0
    %1161 = vmatpush2.msra.mxu0 0.0
    %1162 = vmatprep.subr.mxu0 0.0
    %1163 = vmatpush2.msra.mxu0 0.0
    %1164 = vmatprep.mubr.f32.mxu0 0.0
    %1165 = vmatmul.mubr.f32.gmra.mxu0 %v1098
    %v1166 = vpop.f32.mrf.mxu0
    %v1167 = vadd.f32 0.0, %v1166
    %v1168 = vpop.f32.mrf.mxu0
    %1169 = vdwg.mxu0
    %v1170 = vadd.f32 %v1093, %v1167
    %v1171 = vxor.u32 %v1170, 2147483648
    %v1172 = vmul.f32 %v1171, 1.442695
    %v1173 = vpow.pop %v1172
    %v1174 = vadd.f32 %v1173, 1.0
    %v1175 = vrcp.pop %v1174
    %v1176 = vmul.f32 1.0, %v1175
    %v1177 = vadd.f32 %v1167, %v370
    %v1178 = vtanh.pop %v1177
    %v1179 = vmul.f32 %v1176, %v1074
    %1181 = vrot.lane.b32.xlu0 %v1178, 32
    %v1182 = vpop.permute.xlu0 %1181
    %v1184 = vmul.f32 %v1176, %v1182
    %1186 = vrot.lane.b32.xlu0 %v1184, 32
    %v1187 = vpop.permute.xlu0 %1186
    %v1189 = vadd.f32 %v1179, %v1187
    %v1190 = vtanh.pop %v1189
    %1192 = vrot.lane.b32.xlu0 %v1095, 32
    %v1193 = vpop.permute.xlu0 %1192
    %v1195 = vadd.f32 %v1190, %v1193
    %1197 = vrot.lane.b32.xlu0 %v1195, 32
    %v1198 = vpop.permute.xlu0 %1197
    %v1200 = vmul.f32 %v1176, %v1198
    %1202 = vrot.lane.b32.xlu0 %v1200, 64
    %v1203 = vpop.permute.xlu0 %1202
    %s1205 = scalar_lea.vmem [#allocation12], 14
    %1206 = vst.msk [vmem:[%s1205] sm:$0x3] %vm400, %v1203
    %1207 = vst.msk [vmem:[#allocation13] sm:$0x3] %vm400, %v1203
    %1209 = vrot.lane.b32.xlu0 %v1189, 96
    %v1210 = vpop.permute.xlu0 %1209
    %1212 = vst.msk [vmem:[#allocation15] sm:$0x3] %vm400, %v1210
    // Predicated region
    $region50: #{tpu_custom_call.1} parent=1 // pred_check
      _
    $region51: #{tpu_custom_call.1} parent=1 // pred_check_branch
      %1214 = sbr.rel (0) target = $region53
    $region52: #{tpu_custom_call.1} parent=1 // pred_region
      %s1216 = ssub.s32 256, 256
      %1217 = vsyncadd [#allocation6], %s1216
      %s1218 = sshll.u32 [#allocation12], 4
      %s1219 = int_to_ptr.vmem [resolvable:$true] %s1218
      %1224 = dma.vmem_to_hbm [thread:$0]  %s1219, 256, %s8, [#allocation6], 32, 32, 2
    $region53: #{tpu_custom_call.1} parent=1 // pred_fallthru
      _
    // Predicated region
    $region54: #{tpu_custom_call.1} parent=1 // pred_check
      _
    $region55: #{tpu_custom_call.1} parent=1 // pred_check_branch
      %1226 = sbr.rel (0) target = $region57
    $region56: #{tpu_custom_call.1} parent=1 // pred_region
      %s1228 = ssub.s32 32, 32
      %1229 = vsyncadd [#allocation14], %s1228
      %s1231 = sshll.u32 [#allocation13], 4
      %s1232 = int_to_ptr.vmem [resolvable:$true] %s1231
      %1234 = dma.vmem_to_hbm [thread:$0]  %s1232, 32, %s9, [#allocation14]
    $region57: #{tpu_custom_call.1} parent=1 // pred_fallthru
      _
    // Predicated region
    $region58: #{tpu_custom_call.1} parent=1 // pred_check
      _
    $region59: #{tpu_custom_call.1} parent=1 // pred_check_branch
      %1236 = sbr.rel (0) target = $region61
    $region60: #{tpu_custom_call.1} parent=1 // pred_region
      %s1238 = ssub.s32 32, 32
      %1239 = vsyncadd [#allocation14], %s1238
      %s1241 = sshll.u32 [#allocation15], 4
      %s1242 = int_to_ptr.vmem [resolvable:$true] %s1241
      %1244 = dma.vmem_to_hbm [thread:$0]  %s1242, 32, %s10, [#allocation14]
    $region61: #{tpu_custom_call.1} parent=1 // pred_fallthru
      _
    // Predicated region
    $region62: #{tpu_custom_call.1} parent=1 // pred_check
      _
    $region63: #{tpu_custom_call.1} parent=1 // pred_check_branch
      %1246 = sbr.rel (0) target = $region65
    $region64: #{tpu_custom_call.1} parent=1 // pred_region
      %1247 = dma.done [#allocation6], 256
    $region65: #{tpu_custom_call.1} parent=1 // pred_fallthru
      _
    // Predicated region
    $region66: #{tpu_custom_call.1} parent=1 // pred_check
      _
    $region67: #{tpu_custom_call.1} parent=1 // pred_check_branch
      %1249 = sbr.rel (0) target = $region69
    $region68: #{tpu_custom_call.1} parent=1 // pred_region
      %1250 = dma.done [#allocation14], 32
    $region69: #{tpu_custom_call.1} parent=1 // pred_fallthru
      _
    // Predicated region
    $region70: #{tpu_custom_call.1} parent=1 // pred_check
      _
    $region71: #{tpu_custom_call.1} parent=1 // pred_check_branch
      %1252 = sbr.rel (0) target = $region73
    $region72: #{tpu_custom_call.1} parent=1 // pred_region
      %1253 = dma.done [#allocation14], 32
    $region73: #{tpu_custom_call.1} parent=1 // pred_fallthru
      _
    %1254 = vsyncpa [#allocation5], 1
    %1255 = vsyncpa [#allocation8], 1
    %1256 = vsyncpa [#allocation11], 1
    %1257 = vsyncpa [#allocation6], 1
    %1258 = vsyncpa [#allocation14], 1

</llo_original>
